<compile_context>
chip_gen: v6e
topology: v6e:2x2x1
jax: 0.10.0
libtpu: 0.0.40
codegen_flags: <defaults>
</compile_context>

<pallas_src>
from functools import partial

import jax
import jax.numpy as jnp
from jax.experimental import pallas as pl
from jax.experimental.pallas import tpu as pltpu


def _linear_attention_kernel(x_ref, wqkv_ref, wout_ref, bout_ref, gamma_ref,
                             beta_ref, mask_ref, o_ref, *, heads, dim_head,
                             scale, eps, block_b):
    # x_ref:    (block_b, C_pad, N)       block_b batch items
    # wqkv_ref: (3*hidden, C_pad)         VMEM-resident
    # wout_ref: (C, hidden)               VMEM-resident
    # bout/gamma/beta: (C, 1)             VMEM-resident
    # mask_ref: (block_b*hidden, block_b*hidden) block-diag head/batch mask
    # o_ref:    (block_b, C, N)
    n = x_ref.shape[-1]
    hidden = heads * dim_head
    hb = block_b * hidden

    wqkv = wqkv_ref[...]

    # --- qkv 1x1 conv (channel matmul, f32 MXU accumulate), stacked so that
    #     rows are ordered (batch, head, dim_head) -> block-diag mask layout.
    q_parts, k_parts, v_parts = [], [], []
    for b in range(block_b):
        qkv_b = jnp.dot(wqkv, x_ref[b], preferred_element_type=jnp.float32)  # (3h, N)
        q_parts.append(qkv_b[0 * hidden:1 * hidden])
        k_parts.append(qkv_b[1 * hidden:2 * hidden])
        v_parts.append(qkv_b[2 * hidden:3 * hidden])
    if block_b > 1:
        q2 = jnp.concatenate(q_parts, axis=0)                                # (hb, N)
        k2 = jnp.concatenate(k_parts, axis=0)
        v2 = jnp.concatenate(v_parts, axis=0)
    else:
        q2, k2, v2 = q_parts[0], k_parts[0], v_parts[0]

    # --- q: softmax over dim_head (sublane groups of dim_head); the attention
    #     scale and the 1/sum are folded into a single reduced-size reciprocal.
    q3 = q2.reshape(block_b * heads, dim_head, n)
    qe = jnp.exp(q3 - jnp.max(q3, axis=1, keepdims=True))
    q_inv = pl.reciprocal(jnp.sum(qe, axis=1, keepdims=True), approx=True)
    q2 = (qe * (scale * q_inv)).reshape(hb, n)

    # --- k: softmax over spatial lanes; reciprocal-multiply on the (hb,1) sums.
    ke = jnp.exp(k2 - jnp.max(k2, axis=1, keepdims=True))
    k_inv = pl.reciprocal(jnp.sum(ke, axis=1, keepdims=True), approx=True)
    k2 = ke * k_inv

    # --- attention core: two full-width matmuls + block-diagonal mask.
    # context_full[e, d] = sum_n v2[e, n] * k2[d, n]; off-diagonal head/batch
    # 32x32 blocks are zeroed so this equals the per-head contraction exactly.
    context = jax.lax.dot_general(v2, k2, (((1,), (1,)), ((), ())),
                                  preferred_element_type=jnp.float32)        # (hb, hb)
    context = context * mask_ref[...]
    out2 = jnp.dot(context, q2, preferred_element_type=jnp.float32)          # (hb, N)

    # --- output 1x1 conv + bias + GroupNorm(1, C), per batch item.
    wout = wout_ref[...]
    bout = bout_ref[...]
    gamma = gamma_ref[...]
    beta = beta_ref[...]
    for b in range(block_b):
        y = jnp.dot(wout, out2[b * hidden:(b + 1) * hidden],
                    preferred_element_type=jnp.float32) + bout               # (C, N)
        mean = jnp.mean(y, keepdims=True)
        centered = y - mean                                                  # reused
        var = jnp.mean(centered * centered, keepdims=True)
        gscale = gamma * jax.lax.rsqrt(var + eps)                            # (C, 1)
        o_ref[b] = (centered * gscale + beta).astype(o_ref.dtype)


def linear_attention(x, wqkv, wout, bout, gamma, beta, *, heads, dim_head,
                     eps=1e-5, block_b=None):
    """y = LinearAttention(x), fused in one Pallas kernel (grid over batch blocks).

    x:     (B, C, H, W) float32
    wqkv:  (3*heads*dim_head, C)   1x1-conv weight, no bias
    wout:  (C, heads*dim_head)     1x1-conv weight
    bout:  (C,)                    1x1-conv bias
    gamma, beta: (C,)              GroupNorm(1, C) affine params
    """
    B, C, H, W = x.shape
    N = H * W
    hidden = heads * dim_head
    assert wqkv.shape == (3 * hidden, C)
    assert wout.shape == (C, hidden)
    assert dim_head % 8 == 0 and hidden % 128 == 0
    # TODO(synk): spatial sizes with N % 128 != 0 need in-kernel masking of the
    # k-softmax / GroupNorm reductions (pad-and-mask); not implemented here.
    assert N % 128 == 0, "flattened spatial dim must be a multiple of 128"

    # Batch blocking: block_b=2 fills the 256-wide MXU (v6e/v7x) in the
    # attention-core matmuls; keep >=2 grid steps for megacore / pipelining.
    if block_b is None:
        block_b = 2 if (B % 2 == 0 and B >= 4) else 1
    assert B % block_b == 0
    grid_b = B // block_b

    # Zero-pad the contracting channel dim to a sublane multiple only (exact
    # math; deliberately NOT padded to 128 — would 16x the weight/x footprint).
    C_pad = ((C + 7) // 8) * 8
    x2 = x.reshape(B, C, N)
    if C_pad != C:
        x2 = jnp.pad(x2, ((0, 0), (0, C_pad - C), (0, 0)))
        wqkv_p = jnp.pad(wqkv, ((0, 0), (0, C_pad - C)))
    else:
        wqkv_p = wqkv

    bout2 = bout.reshape(C, 1)
    gamma2 = gamma.reshape(C, 1)
    beta2 = beta.reshape(C, 1)

    # Block-diagonal mask over (batch, head) blocks of size dim_head.
    hb = block_b * hidden
    mask = jnp.kron(jnp.eye(block_b * heads, dtype=jnp.float32),
                    jnp.ones((dim_head, dim_head), dtype=jnp.float32))       # (hb, hb)

    kernel = partial(_linear_attention_kernel, heads=heads, dim_head=dim_head,
                     scale=dim_head ** (-0.5), eps=eps, block_b=block_b)

    # Advisory cost estimate for the XLA scheduler.
    flops = int(B * (2 * 3 * hidden * C_pad * N            # qkv projection
                     + 2 * 2 * block_b * hidden * hidden * N  # context + out (full width)
                     + 2 * C * hidden * N                    # output projection
                     + 10 * hidden * N))                     # elementwise
    transcendentals = int(B * 2 * hidden * N)                # the two softmax exps
    bytes_accessed = int(4 * (x2.size + B * C * N
                              + wqkv_p.size + wout.size + mask.size + 3 * C))

    # Explicit VMEM budget: double-buffered I/O blocks + live f32 intermediates.
    step_bytes = 4 * (2 * block_b * C_pad * N                # x block (2 buffers)
                      + 2 * block_b * C * N                  # out block (2 buffers)
                      + wqkv_p.size + wout.size + mask.size + 3 * C
                      + block_b * 7 * hidden * N             # qkv + q/k/v + out2
                      + hb * hb + 2 * C * N)                 # context + y/centered
    vmem_limit = int(min(max(2 * step_bytes, 32 * 1024 * 1024), 48 * 1024 * 1024))

    out2 = pl.pallas_call(
        kernel,
        out_shape=jax.ShapeDtypeStruct((B, C, N), x.dtype),
        grid_spec=pl.GridSpec(
            grid=(grid_b,),
            in_specs=[
                pl.BlockSpec((block_b, C_pad, N), lambda i: (i, 0, 0)),   # x
                pl.BlockSpec((3 * hidden, C_pad), lambda i: (0, 0)),      # Wqkv (resident)
                pl.BlockSpec((C, hidden), lambda i: (0, 0)),              # Wout (resident)
                pl.BlockSpec((C, 1), lambda i: (0, 0)),                   # bias
                pl.BlockSpec((C, 1), lambda i: (0, 0)),                   # gamma
                pl.BlockSpec((C, 1), lambda i: (0, 0)),                   # beta
                pl.BlockSpec((hb, hb), lambda i: (0, 0)),                 # block-diag mask
            ],
            out_specs=pl.BlockSpec((block_b, C, N), lambda i: (i, 0, 0)),
        ),
        compiler_params=pltpu.CompilerParams(
            dimension_semantics=("parallel",),     # batch blocks independent -> megacore
            vmem_limit_bytes=vmem_limit,
        ),
        cost_estimate=pl.CostEstimate(flops=flops,
                                      transcendentals=transcendentals,
                                      bytes_accessed=bytes_accessed),
    )(x2, wqkv_p, wout, bout2, gamma2, beta2, mask)

    return out2.reshape(B, C, H, W)


def reference(x, wqkv, wout, bout, gamma, beta, *, heads, dim_head, eps=1e-5):
    B, C, H, W = x.shape
    N = H * W
    hidden = heads * dim_head
    scale = dim_head ** (-0.5)
    x2 = x.reshape(B, C, N)
    qkv = jnp.einsum("oc,bcn->bon", wqkv, x2)
    q, k, v = jnp.split(qkv, 3, axis=1)
    q = q.reshape(B, heads, dim_head, N)
    k = k.reshape(B, heads, dim_head, N)
    v = v.reshape(B, heads, dim_head, N)
    q = jax.nn.softmax(q, axis=2) * scale
    k = jax.nn.softmax(k, axis=3)
    context = jnp.einsum("bhdn,bhen->bhde", k, v)
    out = jnp.einsum("bhde,bhdn->bhen", context, q)
    out = out.reshape(B, hidden, N)
    y = jnp.einsum("oi,bin->bon", wout, out) + bout[None, :, None]
    mean = jnp.mean(y, axis=(1, 2), keepdims=True)
    var = jnp.mean((y - mean) ** 2, axis=(1, 2), keepdims=True)
    y = (y - mean) / jnp.sqrt(var + eps)
    y = y * gamma[None, :, None] + beta[None, :, None]
    return y.reshape(B, C, H, W)


def _run_case(key, B, C, Hs, Ws, heads, dim_head):
    kx, kq, kw, kb, kg, kbt = jax.random.split(key, 6)
    hidden = heads * dim_head

    x = jax.random.normal(kx, (B, C, Hs, Ws), dtype=jnp.float32)

    bnd_qkv = 1.0 / (C ** 0.5)
    wqkv = jax.random.uniform(kq, (3 * hidden, C), minval=-bnd_qkv,
                              maxval=bnd_qkv, dtype=jnp.float32)
    bnd_out = 1.0 / (hidden ** 0.5)
    wout = jax.random.uniform(kw, (C, hidden), minval=-bnd_out,
                              maxval=bnd_out, dtype=jnp.float32)
    bout = jax.random.uniform(kb, (C,), minval=-bnd_out, maxval=bnd_out,
                              dtype=jnp.float32)
    gamma = 1.0 + 0.1 * jax.random.normal(kg, (C,), dtype=jnp.float32)
    beta = 0.1 * jax.random.normal(kbt, (C,), dtype=jnp.float32)

    y = linear_attention(x, wqkv, wout, bout, gamma, beta,
                         heads=heads, dim_head=dim_head)
    y = jax.block_until_ready(y)

    y_ref = reference(x, wqkv, wout, bout, gamma, beta,
                      heads=heads, dim_head=dim_head)
    # Tolerance loosened slightly vs pure-f32: pl.reciprocal(approx=True) in the
    # softmax denominators has ~2^-12 relative error.
    err = float(jnp.max(jnp.abs(y - y_ref)))
    assert jnp.allclose(y, y_ref, atol=5e-3, rtol=5e-3), err


if __name__ == "__main__":
    key = jax.random.PRNGKey(0)
    k1, k2 = jax.random.split(key, 2)

    # Base case from the module spec: B=2, C=4, 16x16 spatial, 4 heads x 32.
    # (block_b=1, grid=(2,): exercises the padded-C path, megacore-parallel grid.)
    _run_case(k1, B=2, C=4, Hs=16, Ws=16, heads=4, dim_head=32)

    # Batched case: B=4 -> block_b=2, grid=(2,): exercises the 256-wide stacked
    # block-diagonal attention core (fills the v6e/v7x MXU).
    _run_case(k2, B=4, C=8, Hs=16, Ws=16, heads=4, dim_head=32)

    print("KERNEL_OK")
</pallas_src>

<mosaic_0001>
module attributes {stable_mosaic.version = 11 : i64} {
  func.func @_linear_attention_kernel(%arg0: i32, %arg1: memref<1x8x256xf32, #tpu.memory_space<vmem>>, %arg2: memref<384x8xf32, #tpu.memory_space<vmem>>, %arg3: memref<4x128xf32, #tpu.memory_space<vmem>>, %arg4: memref<4x1xf32, #tpu.memory_space<vmem>>, %arg5: memref<4x1xf32, #tpu.memory_space<vmem>>, %arg6: memref<4x1xf32, #tpu.memory_space<vmem>>, %arg7: memref<128x128xf32, #tpu.memory_space<vmem>>, %arg8: memref<1x4x256xf32, #tpu.memory_space<vmem>>) attributes {dimension_semantics = [#tpu.dimension_semantics<parallel>], iteration_bounds = array<i64: 2>, scalar_prefetch = 0 : i64, scratch_operands = 0 : i64, tpu.core_type = #tpu.core_type<tc>, window_params = [{transform_indices = @transform_0, window_bounds = array<i64: 1, 8, 256>}, {pipeline_mode = #tpu.pipeline_mode<synchronous>, transform_indices = @transform_1, window_bounds = array<i64: 384, 8>}, {pipeline_mode = #tpu.pipeline_mode<synchronous>, transform_indices = @transform_2, window_bounds = array<i64: 4, 128>}, {pipeline_mode = #tpu.pipeline_mode<synchronous>, transform_indices = @transform_3, window_bounds = array<i64: 4, 1>}, {pipeline_mode = #tpu.pipeline_mode<synchronous>, transform_indices = @transform_4, window_bounds = array<i64: 4, 1>}, {pipeline_mode = #tpu.pipeline_mode<synchronous>, transform_indices = @transform_5, window_bounds = array<i64: 4, 1>}, {pipeline_mode = #tpu.pipeline_mode<synchronous>, transform_indices = @transform_6, window_bounds = array<i64: 128, 128>}, {transform_indices = @transform_7, window_bounds = array<i64: 1, 4, 256>}]} {
    %c0 = arith.constant 0 : index
    %c0_0 = arith.constant 0 : index
    %0 = vector.load %arg2[%c0, %c0_0] : memref<384x8xf32, #tpu.memory_space<vmem>>, vector<384x8xf32>
    %c0_1 = arith.constant 0 : index
    %c0_2 = arith.constant 0 : index
    %c0_3 = arith.constant 0 : index
    %1 = vector.load %arg1[%c0_1, %c0_2, %c0_3] : memref<1x8x256xf32, #tpu.memory_space<vmem>>, vector<1x8x256xf32>
    %2 = vector.shape_cast %1 : vector<1x8x256xf32> to vector<8x256xf32>
    %cst = arith.constant dense<0.000000e+00> : vector<384x256xf32>
    %3 = tpu.matmul %0, %2, %cst {dimension_numbers = #tpu.dot_dimension_numbers<[1], [0], [0], [1], [0, 0, 1, 1], [], []>} : vector<384x8xf32>, vector<8x256xf32>, vector<384x256xf32> -> vector<384x256xf32>
    %4 = vector.extract_strided_slice %3 {offsets = [0, 0], sizes = [128, 256], strides = [1, 1]} : vector<384x256xf32> to vector<128x256xf32>
    %5 = vector.extract_strided_slice %3 {offsets = [128, 0], sizes = [128, 256], strides = [1, 1]} : vector<384x256xf32> to vector<128x256xf32>
    %6 = vector.extract_strided_slice %3 {offsets = [256, 0], sizes = [128, 256], strides = [1, 1]} : vector<384x256xf32> to vector<128x256xf32>
    %7 = vector.shape_cast %4 : vector<128x256xf32> to vector<4x32x256xf32>
    %cst_4 = arith.constant dense<0xFF800000> : vector<4x256xf32>
    %8 = vector.multi_reduction <maximumf>, %7, %cst_4 [1] : vector<4x32x256xf32> to vector<4x256xf32>
    %9 = vector.shape_cast %8 : vector<4x256xf32> to vector<4x1x256xf32>
    %10 = vector.broadcast %9 : vector<4x1x256xf32> to vector<4x32x256xf32>
    %11 = arith.subf %7, %10 : vector<4x32x256xf32>
    %12 = math.exp %11 : vector<4x32x256xf32>
    %cst_5 = arith.constant dense<0.000000e+00> : vector<4x256xf32>
    %13 = vector.multi_reduction <add>, %12, %cst_5 [1] : vector<4x32x256xf32> to vector<4x256xf32>
    %14 = vector.shape_cast %13 : vector<4x256xf32> to vector<4x1x256xf32>
    %15 = tpu.reciprocal %14 {approx = true} : vector<4x1x256xf32> -> vector<4x1x256xf32>
    %cst_6 = arith.constant 0.176776692 : f32
    %16 = vector.broadcast %cst_6 : f32 to vector<4x1x256xf32>
    %17 = arith.mulf %16, %15 : vector<4x1x256xf32>
    %18 = vector.broadcast %17 : vector<4x1x256xf32> to vector<4x32x256xf32>
    %19 = arith.mulf %12, %18 : vector<4x32x256xf32>
    %20 = vector.shape_cast %19 : vector<4x32x256xf32> to vector<128x256xf32>
    %cst_7 = arith.constant dense<0xFF800000> : vector<128xf32>
    %21 = vector.multi_reduction <maximumf>, %5, %cst_7 [1] : vector<128x256xf32> to vector<128xf32>
    %22 = vector.shape_cast %21 : vector<128xf32> to vector<128x1xf32>
    %23 = vector.broadcast %22 : vector<128x1xf32> to vector<128x256xf32>
    %24 = arith.subf %5, %23 : vector<128x256xf32>
    %25 = math.exp %24 : vector<128x256xf32>
    %cst_8 = arith.constant dense<0.000000e+00> : vector<128xf32>
    %26 = vector.multi_reduction <add>, %25, %cst_8 [1] : vector<128x256xf32> to vector<128xf32>
    %27 = vector.shape_cast %26 : vector<128xf32> to vector<128x1xf32>
    %28 = tpu.reciprocal %27 {approx = true} : vector<128x1xf32> -> vector<128x1xf32>
    %29 = vector.broadcast %28 : vector<128x1xf32> to vector<128x256xf32>
    %30 = arith.mulf %25, %29 : vector<128x256xf32>
    %cst_9 = arith.constant dense<0.000000e+00> : vector<128x128xf32>
    %31 = tpu.matmul %6, %30, %cst_9 {dimension_numbers = #tpu.dot_dimension_numbers<[1], [1], [0], [0], [0, 0, 1, 0], [], []>} : vector<128x256xf32>, vector<128x256xf32>, vector<128x128xf32> -> vector<128x128xf32>
    %c0_10 = arith.constant 0 : index
    %c0_11 = arith.constant 0 : index
    %32 = vector.load %arg7[%c0_10, %c0_11] : memref<128x128xf32, #tpu.memory_space<vmem>>, vector<128x128xf32>
    %33 = arith.mulf %31, %32 : vector<128x128xf32>
    %cst_12 = arith.constant dense<0.000000e+00> : vector<128x256xf32>
    %34 = tpu.matmul %33, %20, %cst_12 {dimension_numbers = #tpu.dot_dimension_numbers<[1], [0], [0], [1], [0, 0, 1, 1], [], []>} : vector<128x128xf32>, vector<128x256xf32>, vector<128x256xf32> -> vector<128x256xf32>
    %c0_13 = arith.constant 0 : index
    %c0_14 = arith.constant 0 : index
    %35 = vector.load %arg3[%c0_13, %c0_14] : memref<4x128xf32, #tpu.memory_space<vmem>>, vector<4x128xf32>
    %c0_15 = arith.constant 0 : index
    %c0_16 = arith.constant 0 : index
    %36 = vector.load %arg4[%c0_15, %c0_16] : memref<4x1xf32, #tpu.memory_space<vmem>>, vector<4x1xf32>
    %c0_17 = arith.constant 0 : index
    %c0_18 = arith.constant 0 : index
    %37 = vector.load %arg5[%c0_17, %c0_18] : memref<4x1xf32, #tpu.memory_space<vmem>>, vector<4x1xf32>
    %c0_19 = arith.constant 0 : index
    %c0_20 = arith.constant 0 : index
    %38 = vector.load %arg6[%c0_19, %c0_20] : memref<4x1xf32, #tpu.memory_space<vmem>>, vector<4x1xf32>
    %cst_21 = arith.constant dense<0.000000e+00> : vector<4x256xf32>
    %39 = tpu.matmul %35, %34, %cst_21 {dimension_numbers = #tpu.dot_dimension_numbers<[1], [0], [0], [1], [0, 0, 1, 1], [], []>} : vector<4x128xf32>, vector<128x256xf32>, vector<4x256xf32> -> vector<4x256xf32>
    %40 = vector.broadcast %36 : vector<4x1xf32> to vector<4x256xf32>
    %41 = arith.addf %39, %40 : vector<4x256xf32>
    %42 = vector.shape_cast %41 : vector<4x256xf32> to vector<1x4x256xf32>
    %cst_22 = arith.constant dense<0.000000e+00> : vector<1xf32>
    %43 = vector.multi_reduction <add>, %42, %cst_22 [1, 2] : vector<1x4x256xf32> to vector<1xf32>
    %44 = vector.shape_cast %43 : vector<1xf32> to vector<1x1x1xf32>
    %45 = vector.extract %44[0, 0, 0] : f32 from vector<1x1x1xf32>
    %46 = vector.broadcast %45 : f32 to vector<1x1xf32>
    %cst_23 = arith.constant 1.024000e+03 : f32
    %47 = vector.broadcast %cst_23 : f32 to vector<1x1xf32>
    %48 = arith.divf %46, %47 : vector<1x1xf32>
    %49 = vector.broadcast %48 : vector<1x1xf32> to vector<4x256xf32>
    %50 = arith.subf %41, %49 : vector<4x256xf32>
    %51 = arith.mulf %50, %50 : vector<4x256xf32>
    %52 = vector.shape_cast %51 : vector<4x256xf32> to vector<1x4x256xf32>
    %cst_24 = arith.constant dense<0.000000e+00> : vector<1xf32>
    %53 = vector.multi_reduction <add>, %52, %cst_24 [1, 2] : vector<1x4x256xf32> to vector<1xf32>
    %54 = vector.shape_cast %53 : vector<1xf32> to vector<1x1x1xf32>
    %55 = vector.extract %54[0, 0, 0] : f32 from vector<1x1x1xf32>
    %56 = vector.broadcast %55 : f32 to vector<1x1xf32>
    %cst_25 = arith.constant 1.024000e+03 : f32
    %57 = vector.broadcast %cst_25 : f32 to vector<1x1xf32>
    %58 = arith.divf %56, %57 : vector<1x1xf32>
    %cst_26 = arith.constant 9.99999974E-6 : f32
    %59 = vector.broadcast %cst_26 : f32 to vector<1x1xf32>
    %60 = arith.addf %58, %59 : vector<1x1xf32>
    %61 = math.rsqrt %60 : vector<1x1xf32>
    %62 = vector.broadcast %61 : vector<1x1xf32> to vector<4x1xf32>
    %63 = arith.mulf %37, %62 : vector<4x1xf32>
    %64 = vector.broadcast %63 : vector<4x1xf32> to vector<4x256xf32>
    %65 = arith.mulf %50, %64 : vector<4x256xf32>
    %66 = vector.broadcast %38 : vector<4x1xf32> to vector<4x256xf32>
    %67 = arith.addf %65, %66 : vector<4x256xf32>
    %c0_27 = arith.constant 0 : index
    %c0_28 = arith.constant 0 : index
    %c0_29 = arith.constant 0 : index
    %68 = vector.load %arg8[%c0_27, %c0_28, %c0_29] : memref<1x4x256xf32, #tpu.memory_space<vmem>>, vector<1x4x256xf32>
    %69 = vector.shape_cast %68 : vector<1x4x256xf32> to vector<4x256xf32>
    %70 = vector.shape_cast %67 : vector<4x256xf32> to vector<1x4x256xf32>
    tpu.vector_store %arg8[%c0_27, %c0_28, %c0_29], %70 {strides = array<i32>} : memref<1x4x256xf32, #tpu.memory_space<vmem>>, vector<1x4x256xf32>,
    return
  }
  func.func @transform_0(%arg0: i32) -> (i32, i32, i32) {
    %c0_i32 = arith.constant 0 : i32
    %c0_i32_0 = arith.constant 0 : i32
    %c0_i32_1 = arith.constant 0 : i32
    return %arg0, %c0_i32, %c0_i32_0 : i32, i32, i32
  }
  func.func @transform_1(%arg0: i32) -> (i32, i32) {
    %c0_i32 = arith.constant 0 : i32
    %c0_i32_0 = arith.constant 0 : i32
    %c0_i32_1 = arith.constant 0 : i32
    return %c0_i32, %c0_i32_0 : i32, i32
  }
  func.func @transform_2(%arg0: i32) -> (i32, i32) {
    %c0_i32 = arith.constant 0 : i32
    %c0_i32_0 = arith.constant 0 : i32
    %c0_i32_1 = arith.constant 0 : i32
    return %c0_i32, %c0_i32_0 : i32, i32
  }
  func.func @transform_3(%arg0: i32) -> (i32, i32) {
    %c0_i32 = arith.constant 0 : i32
    %c0_i32_0 = arith.constant 0 : i32
    %c0_i32_1 = arith.constant 0 : i32
    return %c0_i32, %c0_i32_0 : i32, i32
  }
  func.func @transform_4(%arg0: i32) -> (i32, i32) {
    %c0_i32 = arith.constant 0 : i32
    %c0_i32_0 = arith.constant 0 : i32
    %c0_i32_1 = arith.constant 0 : i32
    return %c0_i32, %c0_i32_0 : i32, i32
  }
  func.func @transform_5(%arg0: i32) -> (i32, i32) {
    %c0_i32 = arith.constant 0 : i32
    %c0_i32_0 = arith.constant 0 : i32
    %c0_i32_1 = arith.constant 0 : i32
    return %c0_i32, %c0_i32_0 : i32, i32
  }
  func.func @transform_6(%arg0: i32) -> (i32, i32) {
    %c0_i32 = arith.constant 0 : i32
    %c0_i32_0 = arith.constant 0 : i32
    %c0_i32_1 = arith.constant 0 : i32
    return %c0_i32, %c0_i32_0 : i32, i32
  }
  func.func @transform_7(%arg0: i32) -> (i32, i32, i32) {
    %c0_i32 = arith.constant 0 : i32
    %c0_i32_0 = arith.constant 0 : i32
    %c0_i32_1 = arith.constant 0 : i32
    return %arg0, %c0_i32, %c0_i32_0 : i32, i32, i32
  }
}

</mosaic_0001>

<llo_original>
// kernel: tpu_custom_call.1
$region0: #{tpu_custom_call.1}
  #allocation0 [shape = 'u32[]', space=smem, size = 0x4, offset = 0x4, fixed_abs, tag = 'smem constant byte address 0x4 - core index']
  #allocation1 [shape = 'u32[144,128]{1,0:T(1,128)}', space=vmem, size = 0x12000, scoped, tag = 'internal scratch']
  %s0 = inlined_call_operand.vmem [shape: f32[2,8,256], index: 0, kind: input, shape index: {}]
  %s1 = inlined_call_operand.vmem [shape: f32[384,8], index: 1, kind: input, shape index: {}]
  %s2 = inlined_call_operand.vmem [shape: f32[4,128], index: 2, kind: input, shape index: {}]
  %s3 = inlined_call_operand.vmem [shape: f32[4,1], index: 3, kind: input, shape index: {}]
  %s4 = inlined_call_operand.vmem [shape: f32[4,1], index: 4, kind: input, shape index: {}]
  %s5 = inlined_call_operand.vmem [shape: f32[4,1], index: 5, kind: input, shape index: {}]
  %s6 = inlined_call_operand.vmem [shape: f32[128,128], index: 6, kind: input, shape index: {}]
  %s7 = inlined_call_operand.hbm [shape: f32[2,4,256], index: 7, kind: output, shape index: {}]
  %s8 = sld [smem:[#allocation0]]
  $region61: #{tpu_custom_call.1} parent=0
    _
  %s10 = ssub.s32 1, %s8
  %s11 = scalar_select 0, %s10, %s8
  $region1: #{tpu_custom_call.1} parent=0
    #allocation2 [shape = 'u8[8192]{0}', space=vmem, size = 0x2000, scoped, tag = 'output window, operand 0']
    #allocation3 [shape = 's32[2]{0}', space=sflag, size = 0x8, scoped, tag = 'scoped memory for tpu_custom_call.1']
    %12 = vsyncpa [#allocation3], 0
    %s13 = scalar_lea.sflag [#allocation3], 1
    %14 = vsyncpa %s13, 0
    loop: start=0, step=1, limit=4
    $region2: #{tpu_custom_call.1} parent=1 // loop_pre_header
      _
    $region3: #{tpu_custom_call.1} parent=1 // loop_header
      %s16 = sphi 0, %s20
      %p17 = scmp.ge.s32.totalorder %s16, 4
      %s26 = sphi 0, %s28
      %s29 = sphi 0, %s26
      %s30 = sphi 0, %s29
      %s46 = sphi 0, %s30
      %s50 = sphi 0, %s50
      %s52 = sphi 0, %s50
      %s53 = sphi 0, %s52
      %s67 = sphi 0, %s53
      %s71 = sphi 0, %s71
      %s73 = sphi 0, %s71
      %s74 = sphi 0, %s73
      %s88 = sphi 0, %s74
      %s92 = sphi 0, %s92
      %s94 = sphi 0, %s92
      %s95 = sphi 0, %s94
      %s109 = sphi 0, %s95
      %s113 = sphi 0, %s113
      %s115 = sphi 0, %s113
      %s116 = sphi 0, %s115
      %s130 = sphi 0, %s116
      %s134 = sphi 0, %s134
      %s136 = sphi 0, %s134
      %s137 = sphi 0, %s136
      %s151 = sphi 0, %s137
      %s155 = sphi 0, %s155
      %s157 = sphi 0, %s155
      %s158 = sphi 0, %s157
      %s172 = sphi 0, %s158
      %s178 = sphi 0, %s180
      %s181 = sphi 0, %s178
      %s182 = sphi 0, %s181
      %s198 = sphi 0, %s182
    $region4: #{tpu_custom_call.1} parent=1 // loop_header_branch
      %19 = sbr.rel (%p17) target = $region8
    $region5: #{tpu_custom_call.1} parent=1 // loop_body
      %s21 = ssub.s32 %s16, 1
      %s22 = ssub.s32 %s16, 2
      %s23 = sadd.s32 %s16, 1
      %s24 = ssub.s32 %s16, %s23
      %p25 = scmp.eq.s32.totalorder %s24, 0
      %s27 = sadd.s32 %s26, 1
      %s28 = scalar_select %p25, %s26, %s27
      %p31 = pneg %p25
      %p32 = scmp.eq.s32.totalorder %s16, 1
      %p33 = por %p31, %p32
      %p34 = scmp.ne.s32.totalorder %s26, %s29
      %p35 = scmp.eq.s32.totalorder %s16, 0
      %p36 = por %p34, %p35
      %p37 = scmp.ne.s32.totalorder %s26, %s29
      %p38 = scmp.eq.s32.totalorder %s21, 1
      %p39 = por %p37, %p38
      %p40 = scmp.ne.s32.totalorder %s29, %s30
      %p41 = scmp.eq.s32.totalorder %s21, 0
      %p42 = por %p40, %p41
      %p43 = scmp.ne.s32.totalorder %s29, %s30
      %p44 = scmp.eq.s32.totalorder %s22, 1
      %p45 = por %p43, %p44
      %p47 = scmp.ne.s32.totalorder %s30, %s46
      %p48 = scmp.eq.s32.totalorder %s22, 0
      %p49 = por %p47, %p48
      %s51 = sadd.s32 %s50, 1
      %p54 = scmp.eq.s32.totalorder %s16, 1
      %p55 = scmp.ne.s32.totalorder %s50, %s52
      %p56 = scmp.eq.s32.totalorder %s16, 0
      %p57 = por %p55, %p56
      %p58 = scmp.ne.s32.totalorder %s50, %s52
      %p59 = scmp.eq.s32.totalorder %s21, 1
      %p60 = por %p58, %p59
      %p61 = scmp.ne.s32.totalorder %s52, %s53
      %p62 = scmp.eq.s32.totalorder %s21, 0
      %p63 = por %p61, %p62
      %p64 = scmp.ne.s32.totalorder %s52, %s53
      %p65 = scmp.eq.s32.totalorder %s22, 1
      %p66 = por %p64, %p65
      %p68 = scmp.ne.s32.totalorder %s53, %s67
      %p69 = scmp.eq.s32.totalorder %s22, 0
      %p70 = por %p68, %p69
      %s72 = sadd.s32 %s71, 1
      %p75 = scmp.eq.s32.totalorder %s16, 1
      %p76 = scmp.ne.s32.totalorder %s71, %s73
      %p77 = scmp.eq.s32.totalorder %s16, 0
      %p78 = por %p76, %p77
      %p79 = scmp.ne.s32.totalorder %s71, %s73
      %p80 = scmp.eq.s32.totalorder %s21, 1
      %p81 = por %p79, %p80
      %p82 = scmp.ne.s32.totalorder %s73, %s74
      %p83 = scmp.eq.s32.totalorder %s21, 0
      %p84 = por %p82, %p83
      %p85 = scmp.ne.s32.totalorder %s73, %s74
      %p86 = scmp.eq.s32.totalorder %s22, 1
      %p87 = por %p85, %p86
      %p89 = scmp.ne.s32.totalorder %s74, %s88
      %p90 = scmp.eq.s32.totalorder %s22, 0
      %p91 = por %p89, %p90
      %s93 = sadd.s32 %s92, 1
      %p96 = scmp.eq.s32.totalorder %s16, 1
      %p97 = scmp.ne.s32.totalorder %s92, %s94
      %p98 = scmp.eq.s32.totalorder %s16, 0
      %p99 = por %p97, %p98
      %p100 = scmp.ne.s32.totalorder %s92, %s94
      %p101 = scmp.eq.s32.totalorder %s21, 1
      %p102 = por %p100, %p101
      %p103 = scmp.ne.s32.totalorder %s94, %s95
      %p104 = scmp.eq.s32.totalorder %s21, 0
      %p105 = por %p103, %p104
      %p106 = scmp.ne.s32.totalorder %s94, %s95
      %p107 = scmp.eq.s32.totalorder %s22, 1
      %p108 = por %p106, %p107
      %p110 = scmp.ne.s32.totalorder %s95, %s109
      %p111 = scmp.eq.s32.totalorder %s22, 0
      %p112 = por %p110, %p111
      %s114 = sadd.s32 %s113, 1
      %p117 = scmp.eq.s32.totalorder %s16, 1
      %p118 = scmp.ne.s32.totalorder %s113, %s115
      %p119 = scmp.eq.s32.totalorder %s16, 0
      %p120 = por %p118, %p119
      %p121 = scmp.ne.s32.totalorder %s113, %s115
      %p122 = scmp.eq.s32.totalorder %s21, 1
      %p123 = por %p121, %p122
      %p124 = scmp.ne.s32.totalorder %s115, %s116
      %p125 = scmp.eq.s32.totalorder %s21, 0
      %p126 = por %p124, %p125
      %p127 = scmp.ne.s32.totalorder %s115, %s116
      %p128 = scmp.eq.s32.totalorder %s22, 1
      %p129 = por %p127, %p128
      %p131 = scmp.ne.s32.totalorder %s116, %s130
      %p132 = scmp.eq.s32.totalorder %s22, 0
      %p133 = por %p131, %p132
      %s135 = sadd.s32 %s134, 1
      %p138 = scmp.eq.s32.totalorder %s16, 1
      %p139 = scmp.ne.s32.totalorder %s134, %s136
      %p140 = scmp.eq.s32.totalorder %s16, 0
      %p141 = por %p139, %p140
      %p142 = scmp.ne.s32.totalorder %s134, %s136
      %p143 = scmp.eq.s32.totalorder %s21, 1
      %p144 = por %p142, %p143
      %p145 = scmp.ne.s32.totalorder %s136, %s137
      %p146 = scmp.eq.s32.totalorder %s21, 0
      %p147 = por %p145, %p146
      %p148 = scmp.ne.s32.totalorder %s136, %s137
      %p149 = scmp.eq.s32.totalorder %s22, 1
      %p150 = por %p148, %p149
      %p152 = scmp.ne.s32.totalorder %s137, %s151
      %p153 = scmp.eq.s32.totalorder %s22, 0
      %p154 = por %p152, %p153
      %s156 = sadd.s32 %s155, 1
      %p159 = scmp.eq.s32.totalorder %s16, 1
      %p160 = scmp.ne.s32.totalorder %s155, %s157
      %p161 = scmp.eq.s32.totalorder %s16, 0
      %p162 = por %p160, %p161
      %p163 = scmp.ne.s32.totalorder %s155, %s157
      %p164 = scmp.eq.s32.totalorder %s21, 1
      %p165 = por %p163, %p164
      %p166 = scmp.ne.s32.totalorder %s157, %s158
      %p167 = scmp.eq.s32.totalorder %s21, 0
      %p168 = por %p166, %p167
      %p169 = scmp.ne.s32.totalorder %s157, %s158
      %p170 = scmp.eq.s32.totalorder %s22, 1
      %p171 = por %p169, %p170
      %p173 = scmp.ne.s32.totalorder %s158, %s172
      %p174 = scmp.eq.s32.totalorder %s22, 0
      %p175 = por %p173, %p174
      %s176 = ssub.s32 %s16, %s23
      %p177 = scmp.eq.s32.totalorder %s176, 0
      %s179 = sadd.s32 %s178, 1
      %s180 = scalar_select %p177, %s178, %s179
      %p183 = pneg %p177
      %p184 = scmp.eq.s32.totalorder %s16, 1
      %p185 = por %p183, %p184
      %p186 = scmp.ne.s32.totalorder %s178, %s181
      %p187 = scmp.eq.s32.totalorder %s16, 0
      %p188 = por %p186, %p187
      %p189 = scmp.ne.s32.totalorder %s178, %s181
      %p190 = scmp.eq.s32.totalorder %s21, 1
      %p191 = por %p189, %p190
      %p192 = scmp.ne.s32.totalorder %s181, %s182
      %p193 = scmp.eq.s32.totalorder %s21, 0
      %p194 = por %p192, %p193
      %p195 = scmp.ne.s32.totalorder %s181, %s182
      %p196 = scmp.eq.s32.totalorder %s22, 1
      %p197 = por %p195, %p196
      %p199 = scmp.ne.s32.totalorder %s182, %s198
      %p200 = scmp.eq.s32.totalorder %s22, 0
      %p201 = por %p199, %p200
      %p202 = scmp.le.s32.totalorder 1, %s16
      %p203 = scmp.lt.s32.totalorder %s16, 3
      %p204 = pnand %p202, %p203
      %p205 = pneg %p204
      // Predicated region
      $region9: #{tpu_custom_call.1} parent=5 // pred_check
        _
      $region10: #{tpu_custom_call.1} parent=5 // pred_check_branch
        %207 = sbr.rel (%p204) target = $region12
      $region11: #{tpu_custom_call.1} parent=5 // pred_region
        %s208 = ssub.s32 %s16, 1
        // Predicated region
        $region13: #{tpu_custom_call.1} parent=11 // pred_check
          %p209 = pneg %p63
        $region14: #{tpu_custom_call.1} parent=11 // pred_check_branch
          %211 = sbr.rel (%p209) target = $region16
        $region15: #{tpu_custom_call.1} parent=11 // pred_region
          _
        $region16: #{tpu_custom_call.1} parent=11 // pred_fallthru
          _
        // Predicated region
        $region17: #{tpu_custom_call.1} parent=11 // pred_check
          %p212 = pneg %p84
        $region18: #{tpu_custom_call.1} parent=11 // pred_check_branch
          %214 = sbr.rel (%p212) target = $region20
        $region19: #{tpu_custom_call.1} parent=11 // pred_region
          _
        $region20: #{tpu_custom_call.1} parent=11 // pred_fallthru
          _
        // Predicated region
        $region21: #{tpu_custom_call.1} parent=11 // pred_check
          %p215 = pneg %p105
        $region22: #{tpu_custom_call.1} parent=11 // pred_check_branch
          %217 = sbr.rel (%p215) target = $region24
        $region23: #{tpu_custom_call.1} parent=11 // pred_region
          _
        $region24: #{tpu_custom_call.1} parent=11 // pred_fallthru
          _
        // Predicated region
        $region25: #{tpu_custom_call.1} parent=11 // pred_check
          %p218 = pneg %p126
        $region26: #{tpu_custom_call.1} parent=11 // pred_check_branch
          %220 = sbr.rel (%p218) target = $region28
        $region27: #{tpu_custom_call.1} parent=11 // pred_region
          _
        $region28: #{tpu_custom_call.1} parent=11 // pred_fallthru
          _
        // Predicated region
        $region29: #{tpu_custom_call.1} parent=11 // pred_check
          %p221 = pneg %p147
        $region30: #{tpu_custom_call.1} parent=11 // pred_check_branch
          %223 = sbr.rel (%p221) target = $region32
        $region31: #{tpu_custom_call.1} parent=11 // pred_region
          _
        $region32: #{tpu_custom_call.1} parent=11 // pred_fallthru
          _
        // Predicated region
        $region33: #{tpu_custom_call.1} parent=11 // pred_check
          %p224 = pneg %p168
        $region34: #{tpu_custom_call.1} parent=11 // pred_check_branch
          %226 = sbr.rel (%p224) target = $region36
        $region35: #{tpu_custom_call.1} parent=11 // pred_region
          _
        $region36: #{tpu_custom_call.1} parent=11 // pred_fallthru
          _
      $region12: #{tpu_custom_call.1} parent=5 // pred_fallthru
        _
      %p227 = scmp.lt.s32.totalorder %s16, 2
      // Predicated region
      $region37: #{tpu_custom_call.1} parent=5 // pred_check
        %p228 = pneg %p227
      $region38: #{tpu_custom_call.1} parent=5 // pred_check_branch
        %230 = sbr.rel (%p228) target = $region40
      $region39: #{tpu_custom_call.1} parent=5 // pred_region
        // Predicated region
        $region41: #{tpu_custom_call.1} parent=39 // pred_check
          %p231 = pneg %p36
        $region42: #{tpu_custom_call.1} parent=39 // pred_check_branch
          %233 = sbr.rel (%p231) target = $region44
        $region43: #{tpu_custom_call.1} parent=39 // pred_region
          %p234 = scmp.lt.s32.totalorder %s16, 1
          %s235 = scalar_select %p234, %s16, 1
          %s236 = smul.addr %s235, 2
          %s237 = smul.addr %s236, 8
          %s238 = scalar_lea.vmem %s0, %s237
        $region44: #{tpu_custom_call.1} parent=39 // pred_fallthru
          _
      $region40: #{tpu_custom_call.1} parent=5 // pred_fallthru
        _
      %p239 = scmp.le.s32.totalorder 1, %s16
      %p240 = scmp.lt.s32.totalorder %s16, 3
      %p241 = pnand %p239, %p240
      %p242 = pneg %p241
      // Predicated region
      $region45: #{tpu_custom_call.1} parent=5 // pred_check
        _
      $region46: #{tpu_custom_call.1} parent=5 // pred_check_branch
        %244 = sbr.rel (%p241) target = $region48
      $region47: #{tpu_custom_call.1} parent=5 // pred_region
        %s245 = ssub.s32 %s16, 1
        %p246 = scmp.lt.s32.totalorder %s21, 1
        %s247 = scalar_select %p246, %s21, 1
        %s248 = smul.addr %s247, 2
        %s249 = smul.addr %s248, 8
        %s250 = scalar_lea.vmem %s0, %s249
        %p251 = pneg %p42
        %p252 = pneg %p39
        %p253 = pneg %p63
        %p254 = pneg %p60
        %p255 = pneg %p84
        %p256 = pneg %p81
        %p257 = pneg %p105
        %p258 = pneg %p102
        %p259 = pneg %p126
        %p260 = pneg %p123
        %p261 = pneg %p147
        %p262 = pneg %p144
        %p263 = pneg %p168
        %p264 = pneg %p165
        %p265 = pneg %p194
        %p266 = pneg %p191
        %s267 = sand.u32 %s181, 1
        %s268 = scalar_lea.sflag [#allocation3], %s267
        %s269 = sand.u32 %s181, 1
        %s270 = smul.addr %s269, 8
        %s271 = scalar_lea.vmem [#allocation2], %s270
        %p272 = scmp.lt.s32.totalorder %s21, 1
        %s273 = scalar_select %p272, %s21, 1
        %s274 = smul.addr %s273, 2
        %s275 = smul.addr %s274, 8
        %s276 = scalar_lea.vmem %s0, %s275
        %v277 = vld [vmem:[%s1] sm:$0xff]
        %v278 = vld [vmem:[%s1 + $0x8] sm:$0xff]
        %v279 = vld [vmem:[%s1 + $0x10] sm:$0xff]
        %v280 = vld [vmem:[%s1 + $0x18] sm:$0xff]
        %v281 = vld [vmem:[%s1 + $0x20] sm:$0xff]
        %v282 = vld [vmem:[%s1 + $0x28] sm:$0xff]
        %v283 = vld [vmem:[%s1 + $0x30] sm:$0xff]
        %v284 = vld [vmem:[%s1 + $0x38] sm:$0xff]
        %v285 = vld [vmem:[%s1 + $0x40] sm:$0xff]
        %v286 = vld [vmem:[%s1 + $0x48] sm:$0xff]
        %v287 = vld [vmem:[%s1 + $0x50] sm:$0xff]
        %v288 = vld [vmem:[%s1 + $0x58] sm:$0xff]
        %v289 = vld [vmem:[%s1 + $0x60] sm:$0xff]
        %v290 = vld [vmem:[%s1 + $0x68] sm:$0xff]
        %v291 = vld [vmem:[%s1 + $0x70] sm:$0xff]
        %v292 = vld [vmem:[%s1 + $0x78] sm:$0xff]
        %v293 = vld [vmem:[%s1 + $0x80] sm:$0xff]
        %v294 = vld [vmem:[%s1 + $0x88] sm:$0xff]
        %v295 = vld [vmem:[%s1 + $0x90] sm:$0xff]
        %v296 = vld [vmem:[%s1 + $0x98] sm:$0xff]
        %v297 = vld [vmem:[%s1 + $0xa0] sm:$0xff]
        %v298 = vld [vmem:[%s1 + $0xa8] sm:$0xff]
        %v299 = vld [vmem:[%s1 + $0xb0] sm:$0xff]
        %v300 = vld [vmem:[%s1 + $0xb8] sm:$0xff]
        %v301 = vld [vmem:[%s1 + $0xc0] sm:$0xff]
        %v302 = vld [vmem:[%s1 + $0xc8] sm:$0xff]
        %v303 = vld [vmem:[%s1 + $0xd0] sm:$0xff]
        %v304 = vld [vmem:[%s1 + $0xd8] sm:$0xff]
        %v305 = vld [vmem:[%s1 + $0xe0] sm:$0xff]
        %v306 = vld [vmem:[%s1 + $0xe8] sm:$0xff]
        %v307 = vld [vmem:[%s1 + $0xf0] sm:$0xff]
        %v308 = vld [vmem:[%s1 + $0xf8] sm:$0xff]
        %v309 = vld [vmem:[%s1 + $0x100] sm:$0xff]
        %v310 = vld [vmem:[%s1 + $0x108] sm:$0xff]
        %v311 = vld [vmem:[%s1 + $0x110] sm:$0xff]
        %v312 = vld [vmem:[%s1 + $0x118] sm:$0xff]
        %v313 = vld [vmem:[%s1 + $0x120] sm:$0xff]
        %v314 = vld [vmem:[%s1 + $0x128] sm:$0xff]
        %v315 = vld [vmem:[%s1 + $0x130] sm:$0xff]
        %v316 = vld [vmem:[%s1 + $0x138] sm:$0xff]
        %v317 = vld [vmem:[%s1 + $0x140] sm:$0xff]
        %v318 = vld [vmem:[%s1 + $0x148] sm:$0xff]
        %v319 = vld [vmem:[%s1 + $0x150] sm:$0xff]
        %v320 = vld [vmem:[%s1 + $0x158] sm:$0xff]
        %v321 = vld [vmem:[%s1 + $0x160] sm:$0xff]
        %v322 = vld [vmem:[%s1 + $0x168] sm:$0xff]
        %v323 = vld [vmem:[%s1 + $0x170] sm:$0xff]
        %v324 = vld [vmem:[%s1 + $0x178] sm:$0xff]
        %v325 = vld [vmem:[%s276] sm:$0xff]
        %v326 = vld [vmem:[%s276 + $0x8] sm:$0xff]
        %vm327 = vcmask 64512
        %v329 = vsel %vm327, %v277, 0
        %v332 = vsel %vm327, %v278, 0
        %v335 = vsel %vm327, %v279, 0
        %v338 = vsel %vm327, %v280, 0
        %v341 = vsel %vm327, %v281, 0
        %v344 = vsel %vm327, %v282, 0
        %v347 = vsel %vm327, %v283, 0
        %v350 = vsel %vm327, %v284, 0
        %v353 = vsel %vm327, %v285, 0
        %v356 = vsel %vm327, %v286, 0
        %v359 = vsel %vm327, %v287, 0
        %v362 = vsel %vm327, %v288, 0
        %v365 = vsel %vm327, %v289, 0
        %v368 = vsel %vm327, %v290, 0
        %v371 = vsel %vm327, %v291, 0
        %v374 = vsel %vm327, %v292, 0
        %v377 = vsel %vm327, %v293, 0
        %v380 = vsel %vm327, %v294, 0
        %v383 = vsel %vm327, %v295, 0
        %v386 = vsel %vm327, %v296, 0
        %v389 = vsel %vm327, %v297, 0
        %v392 = vsel %vm327, %v298, 0
        %v395 = vsel %vm327, %v299, 0
        %v398 = vsel %vm327, %v300, 0
        %v401 = vsel %vm327, %v301, 0
        %v404 = vsel %vm327, %v302, 0
        %v407 = vsel %vm327, %v303, 0
        %v410 = vsel %vm327, %v304, 0
        %v413 = vsel %vm327, %v305, 0
        %v416 = vsel %vm327, %v306, 0
        %v419 = vsel %vm327, %v307, 0
        %v422 = vsel %vm327, %v308, 0
        %v425 = vsel %vm327, %v309, 0
        %v428 = vsel %vm327, %v310, 0
        %v431 = vsel %vm327, %v311, 0
        %v434 = vsel %vm327, %v312, 0
        %v437 = vsel %vm327, %v313, 0
        %v440 = vsel %vm327, %v314, 0
        %v443 = vsel %vm327, %v315, 0
        %v446 = vsel %vm327, %v316, 0
        %v449 = vsel %vm327, %v317, 0
        %v452 = vsel %vm327, %v318, 0
        %v455 = vsel %vm327, %v319, 0
        %v458 = vsel %vm327, %v320, 0
        %v461 = vsel %vm327, %v321, 0
        %v464 = vsel %vm327, %v322, 0
        %v467 = vsel %vm327, %v323, 0
        %v470 = vsel %vm327, %v324, 0
        %472 = vmatprep.subr.mxu0 0.0
        %473 = vmatpush1.msra.mxu0 0.0
        %474 = vmatprep.subr.mxu0 0.0
        %475 = vmatpush1.msra.mxu0 0.0
        %476 = vmatprep.subr.mxu0 0.0
        %477 = vmatpush1.msra.mxu0 0.0
        %478 = vmatprep.subr.mxu0 0.0
        %479 = vmatpush1.msra.mxu0 0.0
        %480 = vmatprep.subr.mxu0 0.0
        %481 = vmatpush1.msra.mxu0 0.0
        %482 = vmatprep.subr.mxu0 0.0
        %483 = vmatpush1.msra.mxu0 0.0
        %484 = vmatprep.subr.mxu0 0.0
        %485 = vmatpush1.msra.mxu0 0.0
        %486 = vmatprep.subr.mxu0 0.0
        %487 = vmatpush1.msra.mxu0 0.0
        %488 = vmatprep.subr.mxu0 0.0
        %489 = vmatpush1.msra.mxu0 0.0
        %490 = vmatprep.subr.mxu0 0.0
        %491 = vmatpush1.msra.mxu0 0.0
        %492 = vmatprep.subr.mxu0 0.0
        %493 = vmatpush1.msra.mxu0 0.0
        %494 = vmatprep.subr.mxu0 0.0
        %495 = vmatpush1.msra.mxu0 0.0
        %496 = vmatprep.subr.mxu0 0.0
        %497 = vmatpush1.msra.mxu0 0.0
        %498 = vmatprep.subr.mxu0 0.0
        %499 = vmatpush1.msra.mxu0 0.0
        %500 = vmatprep.subr.mxu0 0.0
        %501 = vmatpush1.msra.mxu0 0.0
        %502 = vmatprep.subr.mxu0 %v326
        %503 = vmatpush1.msra.mxu0 %v325
        %504 = vmatprep.subr.mxu0 0.0
        %505 = vmatpush2.msra.mxu0 0.0
        %506 = vmatprep.subr.mxu0 0.0
        %507 = vmatpush2.msra.mxu0 0.0
        %508 = vmatprep.subr.mxu0 0.0
        %509 = vmatpush2.msra.mxu0 0.0
        %510 = vmatprep.subr.mxu0 0.0
        %511 = vmatpush2.msra.mxu0 0.0
        %512 = vmatprep.subr.mxu0 0.0
        %513 = vmatpush2.msra.mxu0 0.0
        %514 = vmatprep.subr.mxu0 0.0
        %515 = vmatpush2.msra.mxu0 0.0
        %516 = vmatprep.subr.mxu0 0.0
        %517 = vmatpush2.msra.mxu0 0.0
        %518 = vmatprep.subr.mxu0 0.0
        %519 = vmatpush2.msra.mxu0 0.0
        %520 = vmatprep.subr.mxu0 0.0
        %521 = vmatpush2.msra.mxu0 0.0
        %522 = vmatprep.subr.mxu0 0.0
        %523 = vmatpush2.msra.mxu0 0.0
        %524 = vmatprep.subr.mxu0 0.0
        %525 = vmatpush2.msra.mxu0 0.0
        %526 = vmatprep.subr.mxu0 0.0
        %527 = vmatpush2.msra.mxu0 0.0
        %528 = vmatprep.subr.mxu0 0.0
        %529 = vmatpush2.msra.mxu0 0.0
        %530 = vmatprep.subr.mxu0 0.0
        %531 = vmatpush2.msra.mxu0 0.0
        %532 = vmatprep.subr.mxu0 0.0
        %533 = vmatpush2.msra.mxu0 0.0
        %534 = vmatprep.subr.mxu0 0.0
        %535 = vmatpush2.msra.mxu0 0.0
        %536 = vmatprep.mubr.f32.mxu0 0.0
        %537 = vmatmul.mubr.f32.gmra.mxu0 %v329
        %v538 = vpop.f32.mrf.mxu0
        %v539 = vadd.f32 0.0, %v538
        %v540 = vpop.f32.mrf.mxu0
        %v541 = vadd.f32 0.0, %v540
        %542 = vmatprep.mubr.f32.mxu0 0.0
        %543 = vmatmul.mubr.f32.gmra.mxu0 %v332
        %v544 = vpop.f32.mrf.mxu0
        %v545 = vadd.f32 0.0, %v544
        %v546 = vpop.f32.mrf.mxu0
        %v547 = vadd.f32 0.0, %v546
        %548 = vmatprep.mubr.f32.mxu0 0.0
        %549 = vmatmul.mubr.f32.gmra.mxu0 %v335
        %v550 = vpop.f32.mrf.mxu0
        %v551 = vadd.f32 0.0, %v550
        %v552 = vpop.f32.mrf.mxu0
        %v553 = vadd.f32 0.0, %v552
        %554 = vmatprep.mubr.f32.mxu0 0.0
        %555 = vmatmul.mubr.f32.gmra.mxu0 %v338
        %v556 = vpop.f32.mrf.mxu0
        %v557 = vadd.f32 0.0, %v556
        %v558 = vpop.f32.mrf.mxu0
        %v559 = vadd.f32 0.0, %v558
        %560 = vmatprep.mubr.f32.mxu0 0.0
        %561 = vmatmul.mubr.f32.gmra.mxu0 %v341
        %v562 = vpop.f32.mrf.mxu0
        %v563 = vadd.f32 0.0, %v562
        %v564 = vpop.f32.mrf.mxu0
        %v565 = vadd.f32 0.0, %v564
        %566 = vmatprep.mubr.f32.mxu0 0.0
        %567 = vmatmul.mubr.f32.gmra.mxu0 %v344
        %v568 = vpop.f32.mrf.mxu0
        %v569 = vadd.f32 0.0, %v568
        %v570 = vpop.f32.mrf.mxu0
        %v571 = vadd.f32 0.0, %v570
        %572 = vmatprep.mubr.f32.mxu0 0.0
        %573 = vmatmul.mubr.f32.gmra.mxu0 %v347
        %v574 = vpop.f32.mrf.mxu0
        %v575 = vadd.f32 0.0, %v574
        %v576 = vpop.f32.mrf.mxu0
        %v577 = vadd.f32 0.0, %v576
        %578 = vmatprep.mubr.f32.mxu0 0.0
        %579 = vmatmul.mubr.f32.gmra.mxu0 %v350
        %v580 = vpop.f32.mrf.mxu0
        %v581 = vadd.f32 0.0, %v580
        %v582 = vpop.f32.mrf.mxu0
        %v583 = vadd.f32 0.0, %v582
        %584 = vmatprep.mubr.f32.mxu0 0.0
        %585 = vmatmul.mubr.f32.gmra.mxu0 %v353
        %v586 = vpop.f32.mrf.mxu0
        %v587 = vadd.f32 0.0, %v586
        %v588 = vpop.f32.mrf.mxu0
        %v589 = vadd.f32 0.0, %v588
        %590 = vmatprep.mubr.f32.mxu0 0.0
        %591 = vmatmul.mubr.f32.gmra.mxu0 %v356
        %v592 = vpop.f32.mrf.mxu0
        %v593 = vadd.f32 0.0, %v592
        %v594 = vpop.f32.mrf.mxu0
        %v595 = vadd.f32 0.0, %v594
        %596 = vmatprep.mubr.f32.mxu0 0.0
        %597 = vmatmul.mubr.f32.gmra.mxu0 %v359
        %v598 = vpop.f32.mrf.mxu0
        %v599 = vadd.f32 0.0, %v598
        %v600 = vpop.f32.mrf.mxu0
        %v601 = vadd.f32 0.0, %v600
        %602 = vmatprep.mubr.f32.mxu0 0.0
        %603 = vmatmul.mubr.f32.gmra.mxu0 %v362
        %v604 = vpop.f32.mrf.mxu0
        %v605 = vadd.f32 0.0, %v604
        %v606 = vpop.f32.mrf.mxu0
        %v607 = vadd.f32 0.0, %v606
        %608 = vmatprep.mubr.f32.mxu0 0.0
        %609 = vmatmul.mubr.f32.gmra.mxu0 %v365
        %v610 = vpop.f32.mrf.mxu0
        %v611 = vadd.f32 0.0, %v610
        %v612 = vpop.f32.mrf.mxu0
        %v613 = vadd.f32 0.0, %v612
        %614 = vmatprep.mubr.f32.mxu0 0.0
        %615 = vmatmul.mubr.f32.gmra.mxu0 %v368
        %v616 = vpop.f32.mrf.mxu0
        %v617 = vadd.f32 0.0, %v616
        %v618 = vpop.f32.mrf.mxu0
        %v619 = vadd.f32 0.0, %v618
        %620 = vmatprep.mubr.f32.mxu0 0.0
        %621 = vmatmul.mubr.f32.gmra.mxu0 %v371
        %v622 = vpop.f32.mrf.mxu0
        %v623 = vadd.f32 0.0, %v622
        %v624 = vpop.f32.mrf.mxu0
        %v625 = vadd.f32 0.0, %v624
        %626 = vmatprep.mubr.f32.mxu0 0.0
        %627 = vmatmul.mubr.f32.gmra.mxu0 %v374
        %v628 = vpop.f32.mrf.mxu0
        %v629 = vadd.f32 0.0, %v628
        %v630 = vpop.f32.mrf.mxu0
        %v631 = vadd.f32 0.0, %v630
        %632 = vmatprep.mubr.f32.mxu0 0.0
        %633 = vmatmul.mubr.f32.gmra.mxu0 %v377
        %v634 = vpop.f32.mrf.mxu0
        %v635 = vadd.f32 0.0, %v634
        %v636 = vpop.f32.mrf.mxu0
        %v637 = vadd.f32 0.0, %v636
        %638 = vmatprep.mubr.f32.mxu0 0.0
        %639 = vmatmul.mubr.f32.gmra.mxu0 %v380
        %v640 = vpop.f32.mrf.mxu0
        %v641 = vadd.f32 0.0, %v640
        %v642 = vpop.f32.mrf.mxu0
        %v643 = vadd.f32 0.0, %v642
        %644 = vmatprep.mubr.f32.mxu0 0.0
        %645 = vmatmul.mubr.f32.gmra.mxu0 %v383
        %v646 = vpop.f32.mrf.mxu0
        %v647 = vadd.f32 0.0, %v646
        %v648 = vpop.f32.mrf.mxu0
        %v649 = vadd.f32 0.0, %v648
        %650 = vmatprep.mubr.f32.mxu0 0.0
        %651 = vmatmul.mubr.f32.gmra.mxu0 %v386
        %v652 = vpop.f32.mrf.mxu0
        %v653 = vadd.f32 0.0, %v652
        %v654 = vpop.f32.mrf.mxu0
        %v655 = vadd.f32 0.0, %v654
        %656 = vmatprep.mubr.f32.mxu0 0.0
        %657 = vmatmul.mubr.f32.gmra.mxu0 %v389
        %v658 = vpop.f32.mrf.mxu0
        %v659 = vadd.f32 0.0, %v658
        %v660 = vpop.f32.mrf.mxu0
        %v661 = vadd.f32 0.0, %v660
        %662 = vmatprep.mubr.f32.mxu0 0.0
        %663 = vmatmul.mubr.f32.gmra.mxu0 %v392
        %v664 = vpop.f32.mrf.mxu0
        %v665 = vadd.f32 0.0, %v664
        %v666 = vpop.f32.mrf.mxu0
        %v667 = vadd.f32 0.0, %v666
        %668 = vmatprep.mubr.f32.mxu0 0.0
        %669 = vmatmul.mubr.f32.gmra.mxu0 %v395
        %v670 = vpop.f32.mrf.mxu0
        %v671 = vadd.f32 0.0, %v670
        %v672 = vpop.f32.mrf.mxu0
        %v673 = vadd.f32 0.0, %v672
        %674 = vmatprep.mubr.f32.mxu0 0.0
        %675 = vmatmul.mubr.f32.gmra.mxu0 %v398
        %v676 = vpop.f32.mrf.mxu0
        %v677 = vadd.f32 0.0, %v676
        %v678 = vpop.f32.mrf.mxu0
        %v679 = vadd.f32 0.0, %v678
        %680 = vmatprep.mubr.f32.mxu0 0.0
        %681 = vmatmul.mubr.f32.gmra.mxu0 %v401
        %v682 = vpop.f32.mrf.mxu0
        %v683 = vadd.f32 0.0, %v682
        %v684 = vpop.f32.mrf.mxu0
        %v685 = vadd.f32 0.0, %v684
        %686 = vmatprep.mubr.f32.mxu0 0.0
        %687 = vmatmul.mubr.f32.gmra.mxu0 %v404
        %v688 = vpop.f32.mrf.mxu0
        %v689 = vadd.f32 0.0, %v688
        %v690 = vpop.f32.mrf.mxu0
        %v691 = vadd.f32 0.0, %v690
        %692 = vmatprep.mubr.f32.mxu0 0.0
        %693 = vmatmul.mubr.f32.gmra.mxu0 %v407
        %v694 = vpop.f32.mrf.mxu0
        %v695 = vadd.f32 0.0, %v694
        %v696 = vpop.f32.mrf.mxu0
        %v697 = vadd.f32 0.0, %v696
        %698 = vmatprep.mubr.f32.mxu0 0.0
        %699 = vmatmul.mubr.f32.gmra.mxu0 %v410
        %v700 = vpop.f32.mrf.mxu0
        %v701 = vadd.f32 0.0, %v700
        %v702 = vpop.f32.mrf.mxu0
        %v703 = vadd.f32 0.0, %v702
        %704 = vmatprep.mubr.f32.mxu0 0.0
        %705 = vmatmul.mubr.f32.gmra.mxu0 %v413
        %v706 = vpop.f32.mrf.mxu0
        %v707 = vadd.f32 0.0, %v706
        %v708 = vpop.f32.mrf.mxu0
        %v709 = vadd.f32 0.0, %v708
        %710 = vmatprep.mubr.f32.mxu0 0.0
        %711 = vmatmul.mubr.f32.gmra.mxu0 %v416
        %v712 = vpop.f32.mrf.mxu0
        %v713 = vadd.f32 0.0, %v712
        %v714 = vpop.f32.mrf.mxu0
        %v715 = vadd.f32 0.0, %v714
        %716 = vmatprep.mubr.f32.mxu0 0.0
        %717 = vmatmul.mubr.f32.gmra.mxu0 %v419
        %v718 = vpop.f32.mrf.mxu0
        %v719 = vadd.f32 0.0, %v718
        %v720 = vpop.f32.mrf.mxu0
        %v721 = vadd.f32 0.0, %v720
        %722 = vmatprep.mubr.f32.mxu0 0.0
        %723 = vmatmul.mubr.f32.gmra.mxu0 %v422
        %v724 = vpop.f32.mrf.mxu0
        %v725 = vadd.f32 0.0, %v724
        %v726 = vpop.f32.mrf.mxu0
        %v727 = vadd.f32 0.0, %v726
        %728 = vmatprep.mubr.f32.mxu0 0.0
        %729 = vmatmul.mubr.f32.gmra.mxu0 %v425
        %v730 = vpop.f32.mrf.mxu0
        %v731 = vadd.f32 0.0, %v730
        %v732 = vpop.f32.mrf.mxu0
        %v733 = vadd.f32 0.0, %v732
        %734 = vmatprep.mubr.f32.mxu0 0.0
        %735 = vmatmul.mubr.f32.gmra.mxu0 %v428
        %v736 = vpop.f32.mrf.mxu0
        %v737 = vadd.f32 0.0, %v736
        %v738 = vpop.f32.mrf.mxu0
        %v739 = vadd.f32 0.0, %v738
        %740 = vmatprep.mubr.f32.mxu0 0.0
        %741 = vmatmul.mubr.f32.gmra.mxu0 %v431
        %v742 = vpop.f32.mrf.mxu0
        %v743 = vadd.f32 0.0, %v742
        %v744 = vpop.f32.mrf.mxu0
        %v745 = vadd.f32 0.0, %v744
        %746 = vmatprep.mubr.f32.mxu0 0.0
        %747 = vmatmul.mubr.f32.gmra.mxu0 %v434
        %v748 = vpop.f32.mrf.mxu0
        %v749 = vadd.f32 0.0, %v748
        %v750 = vpop.f32.mrf.mxu0
        %v751 = vadd.f32 0.0, %v750
        %752 = vmatprep.mubr.f32.mxu0 0.0
        %753 = vmatmul.mubr.f32.gmra.mxu0 %v437
        %v754 = vpop.f32.mrf.mxu0
        %v755 = vadd.f32 0.0, %v754
        %v756 = vpop.f32.mrf.mxu0
        %v757 = vadd.f32 0.0, %v756
        %758 = vmatprep.mubr.f32.mxu0 0.0
        %759 = vmatmul.mubr.f32.gmra.mxu0 %v440
        %v760 = vpop.f32.mrf.mxu0
        %v761 = vadd.f32 0.0, %v760
        %v762 = vpop.f32.mrf.mxu0
        %v763 = vadd.f32 0.0, %v762
        %764 = vmatprep.mubr.f32.mxu0 0.0
        %765 = vmatmul.mubr.f32.gmra.mxu0 %v443
        %v766 = vpop.f32.mrf.mxu0
        %v767 = vadd.f32 0.0, %v766
        %v768 = vpop.f32.mrf.mxu0
        %v769 = vadd.f32 0.0, %v768
        %770 = vmatprep.mubr.f32.mxu0 0.0
        %771 = vmatmul.mubr.f32.gmra.mxu0 %v446
        %v772 = vpop.f32.mrf.mxu0
        %v773 = vadd.f32 0.0, %v772
        %v774 = vpop.f32.mrf.mxu0
        %v775 = vadd.f32 0.0, %v774
        %776 = vmatprep.mubr.f32.mxu0 0.0
        %777 = vmatmul.mubr.f32.gmra.mxu0 %v449
        %v778 = vpop.f32.mrf.mxu0
        %v779 = vadd.f32 0.0, %v778
        %v780 = vpop.f32.mrf.mxu0
        %v781 = vadd.f32 0.0, %v780
        %782 = vmatprep.mubr.f32.mxu0 0.0
        %783 = vmatmul.mubr.f32.gmra.mxu0 %v452
        %v784 = vpop.f32.mrf.mxu0
        %v785 = vadd.f32 0.0, %v784
        %v786 = vpop.f32.mrf.mxu0
        %v787 = vadd.f32 0.0, %v786
        %788 = vmatprep.mubr.f32.mxu0 0.0
        %789 = vmatmul.mubr.f32.gmra.mxu0 %v455
        %v790 = vpop.f32.mrf.mxu0
        %v791 = vadd.f32 0.0, %v790
        %v792 = vpop.f32.mrf.mxu0
        %v793 = vadd.f32 0.0, %v792
        %794 = vmatprep.mubr.f32.mxu0 0.0
        %795 = vmatmul.mubr.f32.gmra.mxu0 %v458
        %v796 = vpop.f32.mrf.mxu0
        %v797 = vadd.f32 0.0, %v796
        %v798 = vpop.f32.mrf.mxu0
        %v799 = vadd.f32 0.0, %v798
        %800 = vmatprep.mubr.f32.mxu0 0.0
        %801 = vmatmul.mubr.f32.gmra.mxu0 %v461
        %v802 = vpop.f32.mrf.mxu0
        %v803 = vadd.f32 0.0, %v802
        %v804 = vpop.f32.mrf.mxu0
        %v805 = vadd.f32 0.0, %v804
        %806 = vmatprep.mubr.f32.mxu0 0.0
        %807 = vmatmul.mubr.f32.gmra.mxu0 %v464
        %v808 = vpop.f32.mrf.mxu0
        %v809 = vadd.f32 0.0, %v808
        %v810 = vpop.f32.mrf.mxu0
        %v811 = vadd.f32 0.0, %v810
        %812 = vmatprep.mubr.f32.mxu0 0.0
        %813 = vmatmul.mubr.f32.gmra.mxu0 %v467
        %v814 = vpop.f32.mrf.mxu0
        %v815 = vadd.f32 0.0, %v814
        %v816 = vpop.f32.mrf.mxu0
        %v817 = vadd.f32 0.0, %v816
        %818 = vmatprep.mubr.f32.mxu0 0.0
        %819 = vmatmul.mubr.f32.gmra.mxu0 %v470
        %v820 = vpop.f32.mrf.mxu0
        %v821 = vadd.f32 0.0, %v820
        %v822 = vpop.f32.mrf.mxu0
        %v823 = vadd.f32 0.0, %v822
        %824 = vdwg.mxu0
        %v825 = vmax.f32 %v539, %v545
        %v826 = vmax.f32 %v825, %v551
        %v827 = vmax.f32 %v826, %v557
        %v828 = vrot.slane %v827, 4
        %v829 = vmax.f32 %v827, %v828
        %v830 = vrot.slane %v829, 2
        %v831 = vmax.f32 %v829, %v830
        %v832 = vrot.slane %v831, 1
        %v833 = vmax.f32 %v831, %v832
        %v834 = vmax.f32 %v541, %v547
        %v835 = vmax.f32 %v834, %v553
        %v836 = vmax.f32 %v835, %v559
        %v837 = vrot.slane %v836, 4
        %v838 = vmax.f32 %v836, %v837
        %v839 = vrot.slane %v838, 2
        %v840 = vmax.f32 %v838, %v839
        %v841 = vrot.slane %v840, 1
        %v842 = vmax.f32 %v840, %v841
        %v843 = vmax.f32 %v563, %v569
        %v844 = vmax.f32 %v843, %v575
        %v845 = vmax.f32 %v844, %v581
        %v846 = vrot.slane %v845, 4
        %v847 = vmax.f32 %v845, %v846
        %v848 = vrot.slane %v847, 2
        %v849 = vmax.f32 %v847, %v848
        %v850 = vrot.slane %v849, 1
        %v851 = vmax.f32 %v849, %v850
        %v852 = vmax.f32 %v565, %v571
        %v853 = vmax.f32 %v852, %v577
        %v854 = vmax.f32 %v853, %v583
        %v855 = vrot.slane %v854, 4
        %v856 = vmax.f32 %v854, %v855
        %v857 = vrot.slane %v856, 2
        %v858 = vmax.f32 %v856, %v857
        %v859 = vrot.slane %v858, 1
        %v860 = vmax.f32 %v858, %v859
        %v861 = vmax.f32 %v587, %v593
        %v862 = vmax.f32 %v861, %v599
        %v863 = vmax.f32 %v862, %v605
        %v864 = vrot.slane %v863, 4
        %v865 = vmax.f32 %v863, %v864
        %v866 = vrot.slane %v865, 2
        %v867 = vmax.f32 %v865, %v866
        %v868 = vrot.slane %v867, 1
        %v869 = vmax.f32 %v867, %v868
        %v870 = vmax.f32 %v589, %v595
        %v871 = vmax.f32 %v870, %v601
        %v872 = vmax.f32 %v871, %v607
        %v873 = vrot.slane %v872, 4
        %v874 = vmax.f32 %v872, %v873
        %v875 = vrot.slane %v874, 2
        %v876 = vmax.f32 %v874, %v875
        %v877 = vrot.slane %v876, 1
        %v878 = vmax.f32 %v876, %v877
        %v879 = vmax.f32 %v611, %v617
        %v880 = vmax.f32 %v879, %v623
        %v881 = vmax.f32 %v880, %v629
        %v882 = vrot.slane %v881, 4
        %v883 = vmax.f32 %v881, %v882
        %v884 = vrot.slane %v883, 2
        %v885 = vmax.f32 %v883, %v884
        %v886 = vrot.slane %v885, 1
        %v887 = vmax.f32 %v885, %v886
        %v888 = vmax.f32 %v613, %v619
        %v889 = vmax.f32 %v888, %v625
        %v890 = vmax.f32 %v889, %v631
        %v891 = vrot.slane %v890, 4
        %v892 = vmax.f32 %v890, %v891
        %v893 = vrot.slane %v892, 2
        %v894 = vmax.f32 %v892, %v893
        %v895 = vrot.slane %v894, 1
        %v896 = vmax.f32 %v894, %v895
        %v897 = vsub.f32 %v539, %v833
        %v898 = vsub.f32 %v541, %v842
        %v899 = vsub.f32 %v545, %v833
        %v900 = vsub.f32 %v547, %v842
        %v901 = vsub.f32 %v551, %v833
        %v902 = vsub.f32 %v553, %v842
        %v903 = vsub.f32 %v557, %v833
        %v904 = vsub.f32 %v559, %v842
        %v905 = vsub.f32 %v563, %v851
        %v906 = vsub.f32 %v565, %v860
        %v907 = vsub.f32 %v569, %v851
        %v908 = vsub.f32 %v571, %v860
        %v909 = vsub.f32 %v575, %v851
        %v910 = vsub.f32 %v577, %v860
        %v911 = vsub.f32 %v581, %v851
        %v912 = vsub.f32 %v583, %v860
        %v913 = vsub.f32 %v587, %v869
        %v914 = vsub.f32 %v589, %v878
        %v915 = vsub.f32 %v593, %v869
        %v916 = vsub.f32 %v595, %v878
        %v917 = vsub.f32 %v599, %v869
        %v918 = vsub.f32 %v601, %v878
        %v919 = vsub.f32 %v605, %v869
        %v920 = vsub.f32 %v607, %v878
        %v921 = vsub.f32 %v611, %v887
        %v922 = vsub.f32 %v613, %v896
        %v923 = vsub.f32 %v617, %v887
        %v924 = vsub.f32 %v619, %v896
        %v925 = vsub.f32 %v623, %v887
        %v926 = vsub.f32 %v625, %v896
        %v927 = vsub.f32 %v629, %v887
        %v928 = vsub.f32 %v631, %v896
        %v929 = vmul.f32 %v897, 1.442695
        %v930 = vpow.pop %v929
        %v931 = vmul.f32 %v898, 1.442695
        %v932 = vpow.pop %v931
        %v933 = vmul.f32 %v899, 1.442695
        %v934 = vpow.pop %v933
        %v935 = vmul.f32 %v900, 1.442695
        %v936 = vpow.pop %v935
        %v937 = vmul.f32 %v901, 1.442695
        %v938 = vpow.pop %v937
        %v939 = vmul.f32 %v902, 1.442695
        %v940 = vpow.pop %v939
        %v941 = vmul.f32 %v903, 1.442695
        %v942 = vpow.pop %v941
        %v943 = vmul.f32 %v904, 1.442695
        %v944 = vpow.pop %v943
        %v945 = vmul.f32 %v905, 1.442695
        %v946 = vpow.pop %v945
        %v947 = vmul.f32 %v906, 1.442695
        %v948 = vpow.pop %v947
        %v949 = vmul.f32 %v907, 1.442695
        %v950 = vpow.pop %v949
        %v951 = vmul.f32 %v908, 1.442695
        %v952 = vpow.pop %v951
        %v953 = vmul.f32 %v909, 1.442695
        %v954 = vpow.pop %v953
        %v955 = vmul.f32 %v910, 1.442695
        %v956 = vpow.pop %v955
        %v957 = vmul.f32 %v911, 1.442695
        %v958 = vpow.pop %v957
        %v959 = vmul.f32 %v912, 1.442695
        %v960 = vpow.pop %v959
        %v961 = vmul.f32 %v913, 1.442695
        %v962 = vpow.pop %v961
        %v963 = vmul.f32 %v914, 1.442695
        %v964 = vpow.pop %v963
        %v965 = vmul.f32 %v915, 1.442695
        %v966 = vpow.pop %v965
        %v967 = vmul.f32 %v916, 1.442695
        %v968 = vpow.pop %v967
        %v969 = vmul.f32 %v917, 1.442695
        %v970 = vpow.pop %v969
        %v971 = vmul.f32 %v918, 1.442695
        %v972 = vpow.pop %v971
        %v973 = vmul.f32 %v919, 1.442695
        %v974 = vpow.pop %v973
        %v975 = vmul.f32 %v920, 1.442695
        %v976 = vpow.pop %v975
        %v977 = vmul.f32 %v921, 1.442695
        %v978 = vpow.pop %v977
        %v979 = vmul.f32 %v922, 1.442695
        %v980 = vpow.pop %v979
        %v981 = vmul.f32 %v923, 1.442695
        %v982 = vpow.pop %v981
        %v983 = vmul.f32 %v924, 1.442695
        %v984 = vpow.pop %v983
        %v985 = vmul.f32 %v925, 1.442695
        %v986 = vpow.pop %v985
        %v987 = vmul.f32 %v926, 1.442695
        %v988 = vpow.pop %v987
        %v989 = vmul.f32 %v927, 1.442695
        %v990 = vpow.pop %v989
        %v991 = vmul.f32 %v928, 1.442695
        %v992 = vpow.pop %v991
        %v993 = vadd.f32 %v930, %v934
        %v994 = vadd.f32 %v993, %v938
        %v995 = vadd.f32 %v994, %v942
        %v996 = vrot.slane %v995, 4
        %v997 = vadd.f32 %v995, %v996
        %v998 = vrot.slane %v997, 2
        %v999 = vadd.f32 %v997, %v998
        %v1000 = vrot.slane %v999, 1
        %v1001 = vadd.f32 %v999, %v1000
        %v1002 = vadd.f32 %v932, %v936
        %v1003 = vadd.f32 %v1002, %v940
        %v1004 = vadd.f32 %v1003, %v944
        %v1005 = vrot.slane %v1004, 4
        %v1006 = vadd.f32 %v1004, %v1005
        %v1007 = vrot.slane %v1006, 2
        %v1008 = vadd.f32 %v1006, %v1007
        %v1009 = vrot.slane %v1008, 1
        %v1010 = vadd.f32 %v1008, %v1009
        %v1011 = vadd.f32 %v946, %v950
        %v1012 = vadd.f32 %v1011, %v954
        %v1013 = vadd.f32 %v1012, %v958
        %v1014 = vrot.slane %v1013, 4
        %v1015 = vadd.f32 %v1013, %v1014
        %v1016 = vrot.slane %v1015, 2
        %v1017 = vadd.f32 %v1015, %v1016
        %v1018 = vrot.slane %v1017, 1
        %v1019 = vadd.f32 %v1017, %v1018
        %v1020 = vadd.f32 %v948, %v952
        %v1021 = vadd.f32 %v1020, %v956
        %v1022 = vadd.f32 %v1021, %v960
        %v1023 = vrot.slane %v1022, 4
        %v1024 = vadd.f32 %v1022, %v1023
        %v1025 = vrot.slane %v1024, 2
        %v1026 = vadd.f32 %v1024, %v1025
        %v1027 = vrot.slane %v1026, 1
        %v1028 = vadd.f32 %v1026, %v1027
        %v1029 = vadd.f32 %v962, %v966
        %v1030 = vadd.f32 %v1029, %v970
        %v1031 = vadd.f32 %v1030, %v974
        %v1032 = vrot.slane %v1031, 4
        %v1033 = vadd.f32 %v1031, %v1032
        %v1034 = vrot.slane %v1033, 2
        %v1035 = vadd.f32 %v1033, %v1034
        %v1036 = vrot.slane %v1035, 1
        %v1037 = vadd.f32 %v1035, %v1036
        %v1038 = vadd.f32 %v964, %v968
        %v1039 = vadd.f32 %v1038, %v972
        %v1040 = vadd.f32 %v1039, %v976
        %v1041 = vrot.slane %v1040, 4
        %v1042 = vadd.f32 %v1040, %v1041
        %v1043 = vrot.slane %v1042, 2
        %v1044 = vadd.f32 %v1042, %v1043
        %v1045 = vrot.slane %v1044, 1
        %v1046 = vadd.f32 %v1044, %v1045
        %v1047 = vadd.f32 %v978, %v982
        %v1048 = vadd.f32 %v1047, %v986
        %v1049 = vadd.f32 %v1048, %v990
        %v1050 = vrot.slane %v1049, 4
        %v1051 = vadd.f32 %v1049, %v1050
        %v1052 = vrot.slane %v1051, 2
        %v1053 = vadd.f32 %v1051, %v1052
        %v1054 = vrot.slane %v1053, 1
        %v1055 = vadd.f32 %v1053, %v1054
        %v1056 = vadd.f32 %v980, %v984
        %v1057 = vadd.f32 %v1056, %v988
        %v1058 = vadd.f32 %v1057, %v992
        %v1059 = vrot.slane %v1058, 4
        %v1060 = vadd.f32 %v1058, %v1059
        %v1061 = vrot.slane %v1060, 2
        %v1062 = vadd.f32 %v1060, %v1061
        %v1063 = vrot.slane %v1062, 1
        %v1064 = vadd.f32 %v1062, %v1063
        %v1065 = vrcp.pop %v1001
        %v1066 = vrcp.pop %v1010
        %v1067 = vrcp.pop %v1019
        %v1068 = vrcp.pop %v1028
        %v1069 = vrcp.pop %v1037
        %v1070 = vrcp.pop %v1046
        %v1071 = vrcp.pop %v1055
        %v1072 = vrcp.pop %v1064
        %v1073 = vmul.f32 %v1065, 0.17677669
        %v1074 = vmul.f32 %v1066, 0.17677669
        %v1075 = vmul.f32 %v1067, 0.17677669
        %v1076 = vmul.f32 %v1068, 0.17677669
        %v1077 = vmul.f32 %v1069, 0.17677669
        %v1078 = vmul.f32 %v1070, 0.17677669
        %v1079 = vmul.f32 %v1071, 0.17677669
        %v1080 = vmul.f32 %v1072, 0.17677669
        %v1081 = vmul.f32 %v930, %v1073
        %v1082 = vmul.f32 %v932, %v1074
        %v1083 = vmul.f32 %v934, %v1073
        %v1084 = vmul.f32 %v936, %v1074
        %v1085 = vmul.f32 %v938, %v1073
        %v1086 = vmul.f32 %v940, %v1074
        %v1087 = vmul.f32 %v942, %v1073
        %v1088 = vmul.f32 %v944, %v1074
        %v1089 = vmul.f32 %v946, %v1075
        %v1090 = vmul.f32 %v948, %v1076
        %v1091 = vmul.f32 %v950, %v1075
        %v1092 = vmul.f32 %v952, %v1076
        %v1093 = vmul.f32 %v954, %v1075
        %v1094 = vmul.f32 %v956, %v1076
        %v1095 = vmul.f32 %v958, %v1075
        %v1096 = vmul.f32 %v960, %v1076
        %v1097 = vmul.f32 %v962, %v1077
        %v1098 = vmul.f32 %v964, %v1078
        %v1099 = vmul.f32 %v966, %v1077
        %v1100 = vmul.f32 %v968, %v1078
        %v1101 = vmul.f32 %v970, %v1077
        %v1102 = vmul.f32 %v972, %v1078
        %v1103 = vmul.f32 %v974, %v1077
        %v1104 = vmul.f32 %v976, %v1078
        %v1105 = vmul.f32 %v978, %v1079
        %v1106 = vmul.f32 %v980, %v1080
        %v1107 = vmul.f32 %v982, %v1079
        %v1108 = vmul.f32 %v984, %v1080
        %v1109 = vmul.f32 %v986, %v1079
        %v1110 = vmul.f32 %v988, %v1080
        %v1111 = vmul.f32 %v990, %v1079
        %v1112 = vmul.f32 %v992, %v1080
        %v1113 = vmax.f32 %v635, %v637
        %1114 = vmax.xlane.f32.xlu0 %v1113
        %v1115 = vpop.xlane.xlu0 %1114
        %v1116 = vmax.f32 %v641, %v643
        %1117 = vmax.xlane.f32.xlu0 %v1116
        %v1118 = vpop.xlane.xlu0 %1117
        %v1119 = vmax.f32 %v647, %v649
        %1120 = vmax.xlane.f32.xlu0 %v1119
        %v1121 = vpop.xlane.xlu0 %1120
        %v1122 = vmax.f32 %v653, %v655
        %1123 = vmax.xlane.f32.xlu0 %v1122
        %v1124 = vpop.xlane.xlu0 %1123
        %v1125 = vmax.f32 %v659, %v661
        %1126 = vmax.xlane.f32.xlu0 %v1125
        %v1127 = vpop.xlane.xlu0 %1126
        %v1128 = vmax.f32 %v665, %v667
        %1129 = vmax.xlane.f32.xlu0 %v1128
        %v1130 = vpop.xlane.xlu0 %1129
        %v1131 = vmax.f32 %v671, %v673
        %1132 = vmax.xlane.f32.xlu0 %v1131
        %v1133 = vpop.xlane.xlu0 %1132
        %v1134 = vmax.f32 %v677, %v679
        %1135 = vmax.xlane.f32.xlu0 %v1134
        %v1136 = vpop.xlane.xlu0 %1135
        %v1137 = vmax.f32 %v683, %v685
        %1138 = vmax.xlane.f32.xlu0 %v1137
        %v1139 = vpop.xlane.xlu0 %1138
        %v1140 = vmax.f32 %v689, %v691
        %1141 = vmax.xlane.f32.xlu0 %v1140
        %v1142 = vpop.xlane.xlu0 %1141
        %v1143 = vmax.f32 %v695, %v697
        %1144 = vmax.xlane.f32.xlu0 %v1143
        %v1145 = vpop.xlane.xlu0 %1144
        %v1146 = vmax.f32 %v701, %v703
        %1147 = vmax.xlane.f32.xlu0 %v1146
        %v1148 = vpop.xlane.xlu0 %1147
        %v1149 = vmax.f32 %v707, %v709
        %1150 = vmax.xlane.f32.xlu0 %v1149
        %v1151 = vpop.xlane.xlu0 %1150
        %v1152 = vmax.f32 %v713, %v715
        %1153 = vmax.xlane.f32.xlu0 %v1152
        %v1154 = vpop.xlane.xlu0 %1153
        %v1155 = vmax.f32 %v719, %v721
        %1156 = vmax.xlane.f32.xlu0 %v1155
        %v1157 = vpop.xlane.xlu0 %1156
        %v1158 = vmax.f32 %v725, %v727
        %1159 = vmax.xlane.f32.xlu0 %v1158
        %v1160 = vpop.xlane.xlu0 %1159
        %v1161 = vsub.f32 %v635, %v1115
        %v1162 = vsub.f32 %v637, %v1115
        %v1163 = vsub.f32 %v641, %v1118
        %v1164 = vsub.f32 %v643, %v1118
        %v1165 = vsub.f32 %v647, %v1121
        %v1166 = vsub.f32 %v649, %v1121
        %v1167 = vsub.f32 %v653, %v1124
        %v1168 = vsub.f32 %v655, %v1124
        %v1169 = vsub.f32 %v659, %v1127
        %v1170 = vsub.f32 %v661, %v1127
        %v1171 = vsub.f32 %v665, %v1130
        %v1172 = vsub.f32 %v667, %v1130
        %v1173 = vsub.f32 %v671, %v1133
        %v1174 = vsub.f32 %v673, %v1133
        %v1175 = vsub.f32 %v677, %v1136
        %v1176 = vsub.f32 %v679, %v1136
        %v1177 = vsub.f32 %v683, %v1139
        %v1178 = vsub.f32 %v685, %v1139
        %v1179 = vsub.f32 %v689, %v1142
        %v1180 = vsub.f32 %v691, %v1142
        %v1181 = vsub.f32 %v695, %v1145
        %v1182 = vsub.f32 %v697, %v1145
        %v1183 = vsub.f32 %v701, %v1148
        %v1184 = vsub.f32 %v703, %v1148
        %v1185 = vsub.f32 %v707, %v1151
        %v1186 = vsub.f32 %v709, %v1151
        %v1187 = vsub.f32 %v713, %v1154
        %v1188 = vsub.f32 %v715, %v1154
        %v1189 = vsub.f32 %v719, %v1157
        %v1190 = vsub.f32 %v721, %v1157
        %v1191 = vsub.f32 %v725, %v1160
        %v1192 = vsub.f32 %v727, %v1160
        %v1193 = vmul.f32 %v1161, 1.442695
        %v1194 = vpow.pop %v1193
        %v1195 = vmul.f32 %v1162, 1.442695
        %v1196 = vpow.pop %v1195
        %v1197 = vmul.f32 %v1163, 1.442695
        %v1198 = vpow.pop %v1197
        %v1199 = vmul.f32 %v1164, 1.442695
        %v1200 = vpow.pop %v1199
        %v1201 = vmul.f32 %v1165, 1.442695
        %v1202 = vpow.pop %v1201
        %v1203 = vmul.f32 %v1166, 1.442695
        %v1204 = vpow.pop %v1203
        %v1205 = vmul.f32 %v1167, 1.442695
        %v1206 = vpow.pop %v1205
        %v1207 = vmul.f32 %v1168, 1.442695
        %v1208 = vpow.pop %v1207
        %v1209 = vmul.f32 %v1169, 1.442695
        %v1210 = vpow.pop %v1209
        %v1211 = vmul.f32 %v1170, 1.442695
        %v1212 = vpow.pop %v1211
        %v1213 = vmul.f32 %v1171, 1.442695
        %v1214 = vpow.pop %v1213
        %v1215 = vmul.f32 %v1172, 1.442695
        %v1216 = vpow.pop %v1215
        %v1217 = vmul.f32 %v1173, 1.442695
        %v1218 = vpow.pop %v1217
        %v1219 = vmul.f32 %v1174, 1.442695
        %v1220 = vpow.pop %v1219
        %v1221 = vmul.f32 %v1175, 1.442695
        %v1222 = vpow.pop %v1221
        %v1223 = vmul.f32 %v1176, 1.442695
        %v1224 = vpow.pop %v1223
        %v1225 = vmul.f32 %v1177, 1.442695
        %v1226 = vpow.pop %v1225
        %v1227 = vmul.f32 %v1178, 1.442695
        %v1228 = vpow.pop %v1227
        %v1229 = vmul.f32 %v1179, 1.442695
        %v1230 = vpow.pop %v1229
        %v1231 = vmul.f32 %v1180, 1.442695
        %v1232 = vpow.pop %v1231
        %v1233 = vmul.f32 %v1181, 1.442695
        %v1234 = vpow.pop %v1233
        %v1235 = vmul.f32 %v1182, 1.442695
        %v1236 = vpow.pop %v1235
        %v1237 = vmul.f32 %v1183, 1.442695
        %v1238 = vpow.pop %v1237
        %v1239 = vmul.f32 %v1184, 1.442695
        %v1240 = vpow.pop %v1239
        %v1241 = vmul.f32 %v1185, 1.442695
        %v1242 = vpow.pop %v1241
        %v1243 = vmul.f32 %v1186, 1.442695
        %v1244 = vpow.pop %v1243
        %v1245 = vmul.f32 %v1187, 1.442695
        %v1246 = vpow.pop %v1245
        %v1247 = vmul.f32 %v1188, 1.442695
        %v1248 = vpow.pop %v1247
        %v1249 = vmul.f32 %v1189, 1.442695
        %v1250 = vpow.pop %v1249
        %v1251 = vmul.f32 %v1190, 1.442695
        %v1252 = vpow.pop %v1251
        %v1253 = vmul.f32 %v1191, 1.442695
        %v1254 = vpow.pop %v1253
        %v1255 = vmul.f32 %v1192, 1.442695
        %v1256 = vpow.pop %v1255
        %v1257 = vadd.f32 %v1194, %v1196
        %1258 = vadd.xlane.f32.xlu0 %v1257
        %v1259 = vpop.xlane.xlu0 %1258
        %v1260 = vadd.f32 %v1198, %v1200
        %1261 = vadd.xlane.f32.xlu0 %v1260
        %v1262 = vpop.xlane.xlu0 %1261
        %v1263 = vadd.f32 %v1202, %v1204
        %1264 = vadd.xlane.f32.xlu0 %v1263
        %v1265 = vpop.xlane.xlu0 %1264
        %v1266 = vadd.f32 %v1206, %v1208
        %1267 = vadd.xlane.f32.xlu0 %v1266
        %v1268 = vpop.xlane.xlu0 %1267
        %v1269 = vadd.f32 %v1210, %v1212
        %1270 = vadd.xlane.f32.xlu0 %v1269
        %v1271 = vpop.xlane.xlu0 %1270
        %v1272 = vadd.f32 %v1214, %v1216
        %1273 = vadd.xlane.f32.xlu0 %v1272
        %v1274 = vpop.xlane.xlu0 %1273
        %v1275 = vadd.f32 %v1218, %v1220
        %1276 = vadd.xlane.f32.xlu0 %v1275
        %v1277 = vpop.xlane.xlu0 %1276
        %v1278 = vadd.f32 %v1222, %v1224
        %1279 = vadd.xlane.f32.xlu0 %v1278
        %v1280 = vpop.xlane.xlu0 %1279
        %v1281 = vadd.f32 %v1226, %v1228
        %1282 = vadd.xlane.f32.xlu0 %v1281
        %v1283 = vpop.xlane.xlu0 %1282
        %v1284 = vadd.f32 %v1230, %v1232
        %1285 = vadd.xlane.f32.xlu0 %v1284
        %v1286 = vpop.xlane.xlu0 %1285
        %v1287 = vadd.f32 %v1234, %v1236
        %1288 = vadd.xlane.f32.xlu0 %v1287
        %v1289 = vpop.xlane.xlu0 %1288
        %v1290 = vadd.f32 %v1238, %v1240
        %1291 = vadd.xlane.f32.xlu0 %v1290
        %v1292 = vpop.xlane.xlu0 %1291
        %v1293 = vadd.f32 %v1242, %v1244
        %1294 = vadd.xlane.f32.xlu0 %v1293
        %v1295 = vpop.xlane.xlu0 %1294
        %v1296 = vadd.f32 %v1246, %v1248
        %1297 = vadd.xlane.f32.xlu0 %v1296
        %v1298 = vpop.xlane.xlu0 %1297
        %v1299 = vadd.f32 %v1250, %v1252
        %1300 = vadd.xlane.f32.xlu0 %v1299
        %v1301 = vpop.xlane.xlu0 %1300
        %v1302 = vadd.f32 %v1254, %v1256
        %1303 = vadd.xlane.f32.xlu0 %v1302
        %v1304 = vpop.xlane.xlu0 %1303
        %v1305 = vrcp.pop %v1259
        %v1306 = vrcp.pop %v1262
        %v1307 = vrcp.pop %v1265
        %v1308 = vrcp.pop %v1268
        %v1309 = vrcp.pop %v1271
        %v1310 = vrcp.pop %v1274
        %v1311 = vrcp.pop %v1277
        %v1312 = vrcp.pop %v1280
        %v1313 = vrcp.pop %v1283
        %v1314 = vrcp.pop %v1286
        %v1315 = vrcp.pop %v1289
        %v1316 = vrcp.pop %v1292
        %v1317 = vrcp.pop %v1295
        %v1318 = vrcp.pop %v1298
        %v1319 = vrcp.pop %v1301
        %v1320 = vrcp.pop %v1304
        %v1321 = vmul.f32 %v1194, %v1305
        %v1322 = vmul.f32 %v1196, %v1305
        %v1323 = vmul.f32 %v1198, %v1306
        %v1324 = vmul.f32 %v1200, %v1306
        %v1325 = vmul.f32 %v1202, %v1307
        %v1326 = vmul.f32 %v1204, %v1307
        %v1327 = vmul.f32 %v1206, %v1308
        %v1328 = vmul.f32 %v1208, %v1308
        %v1329 = vmul.f32 %v1210, %v1309
        %v1330 = vmul.f32 %v1212, %v1309
        %v1331 = vmul.f32 %v1214, %v1310
        %v1332 = vmul.f32 %v1216, %v1310
        %v1333 = vmul.f32 %v1218, %v1311
        %v1334 = vmul.f32 %v1220, %v1311
        %v1335 = vmul.f32 %v1222, %v1312
        %v1336 = vmul.f32 %v1224, %v1312
        %v1337 = vmul.f32 %v1226, %v1313
        %v1338 = vmul.f32 %v1228, %v1313
        %v1339 = vmul.f32 %v1230, %v1314
        %v1340 = vmul.f32 %v1232, %v1314
        %v1341 = vmul.f32 %v1234, %v1315
        %v1342 = vmul.f32 %v1236, %v1315
        %v1343 = vmul.f32 %v1238, %v1316
        %v1344 = vmul.f32 %v1240, %v1316
        %v1345 = vmul.f32 %v1242, %v1317
        %v1346 = vmul.f32 %v1244, %v1317
        %v1347 = vmul.f32 %v1246, %v1318
        %v1348 = vmul.f32 %v1248, %v1318
        %v1349 = vmul.f32 %v1250, %v1319
        %v1350 = vmul.f32 %v1252, %v1319
        %v1351 = vmul.f32 %v1254, %v1320
        %v1352 = vmul.f32 %v1256, %v1320
        %1353 = vmatprep.subr.mxu0 %v1352
        %1354 = vmatpush1.xpose.msra.mxu0 %v1351
        %1355 = vmatprep.subr.mxu0 %v1350
        %1356 = vmatpush1.xpose.msra.mxu0 %v1349
        %1357 = vmatprep.subr.mxu0 %v1348
        %1358 = vmatpush1.xpose.msra.mxu0 %v1347
        %1359 = vmatprep.subr.mxu0 %v1346
        %1360 = vmatpush1.xpose.msra.mxu0 %v1345
        %1361 = vmatprep.subr.mxu0 %v1344
        %1362 = vmatpush1.xpose.msra.mxu0 %v1343
        %1363 = vmatprep.subr.mxu0 %v1342
        %1364 = vmatpush1.xpose.msra.mxu0 %v1341
        %1365 = vmatprep.subr.mxu0 %v1340
        %1366 = vmatpush1.xpose.msra.mxu0 %v1339
        %1367 = vmatprep.subr.mxu0 %v1338
        %1368 = vmatpush1.xpose.msra.mxu0 %v1337
        %1369 = vmatprep.subr.mxu0 %v1336
        %1370 = vmatpush1.xpose.msra.mxu0 %v1335
        %1371 = vmatprep.subr.mxu0 %v1334
        %1372 = vmatpush1.xpose.msra.mxu0 %v1333
        %1373 = vmatprep.subr.mxu0 %v1332
        %1374 = vmatpush1.xpose.msra.mxu0 %v1331
        %1375 = vmatprep.subr.mxu0 %v1330
        %1376 = vmatpush1.xpose.msra.mxu0 %v1329
        %1377 = vmatprep.subr.mxu0 %v1328
        %1378 = vmatpush1.xpose.msra.mxu0 %v1327
        %1379 = vmatprep.subr.mxu0 %v1326
        %1380 = vmatpush1.xpose.msra.mxu0 %v1325
        %1381 = vmatprep.subr.mxu0 %v1324
        %1382 = vmatpush1.xpose.msra.mxu0 %v1323
        %1383 = vmatprep.subr.mxu0 %v1322
        %1384 = vmatpush1.xpose.msra.mxu0 %v1321
        %1385 = vmatprep.subr.mxu0 0.0
        %1386 = vmatpush2.xpose.msra.mxu0 0.0
        %1387 = vmatprep.subr.mxu0 0.0
        %1388 = vmatpush2.xpose.msra.mxu0 0.0
        %1389 = vmatprep.subr.mxu0 0.0
        %1390 = vmatpush2.xpose.msra.mxu0 0.0
        %1391 = vmatprep.subr.mxu0 0.0
        %1392 = vmatpush2.xpose.msra.mxu0 0.0
        %1393 = vmatprep.subr.mxu0 0.0
        %1394 = vmatpush2.xpose.msra.mxu0 0.0
        %1395 = vmatprep.subr.mxu0 0.0
        %1396 = vmatpush2.xpose.msra.mxu0 0.0
        %1397 = vmatprep.subr.mxu0 0.0
        %1398 = vmatpush2.xpose.msra.mxu0 0.0
        %1399 = vmatprep.subr.mxu0 0.0
        %1400 = vmatpush2.xpose.msra.mxu0 0.0
        %1401 = vmatprep.subr.mxu0 0.0
        %1402 = vmatpush2.xpose.msra.mxu0 0.0
        %1403 = vmatprep.subr.mxu0 0.0
        %1404 = vmatpush2.xpose.msra.mxu0 0.0
        %1405 = vmatprep.subr.mxu0 0.0
        %1406 = vmatpush2.xpose.msra.mxu0 0.0
        %1407 = vmatprep.subr.mxu0 0.0
        %1408 = vmatpush2.xpose.msra.mxu0 0.0
        %1409 = vmatprep.subr.mxu0 0.0
        %1410 = vmatpush2.xpose.msra.mxu0 0.0
        %1411 = vmatprep.subr.mxu0 0.0
        %1412 = vmatpush2.xpose.msra.mxu0 0.0
        %1413 = vmatprep.subr.mxu0 0.0
        %1414 = vmatpush2.xpose.msra.mxu0 0.0
        %1415 = vmatprep.subr.mxu0 0.0
        %1416 = vmatpush2.xpose.msra.mxu0 0.0
        %1417 = vmatprep.mubr.f32.mxu0 %v733
        %1418 = vmatmul.mubr.f32.gmra.mxu0 %v731
        %v1419 = vpop.f32.mrf.mxu0
        %v1420 = vadd.f32 0.0, %v1419
        %v1421 = vpop.f32.mrf.mxu0
        %1422 = vmatprep.mubr.f32.mxu0 %v739
        %1423 = vmatmul.mubr.f32.gmra.mxu0 %v737
        %v1424 = vpop.f32.mrf.mxu0
        %v1425 = vadd.f32 0.0, %v1424
        %v1426 = vpop.f32.mrf.mxu0
        %1427 = vmatprep.mubr.f32.mxu0 %v745
        %1428 = vmatmul.mubr.f32.gmra.mxu0 %v743
        %v1429 = vpop.f32.mrf.mxu0
        %v1430 = vadd.f32 0.0, %v1429
        %v1431 = vpop.f32.mrf.mxu0
        %1432 = vmatprep.mubr.f32.mxu0 %v751
        %1433 = vmatmul.mubr.f32.gmra.mxu0 %v749
        %v1434 = vpop.f32.mrf.mxu0
        %v1435 = vadd.f32 0.0, %v1434
        %v1436 = vpop.f32.mrf.mxu0
        %1437 = vmatprep.mubr.f32.mxu0 %v757
        %1438 = vmatmul.mubr.f32.gmra.mxu0 %v755
        %v1439 = vpop.f32.mrf.mxu0
        %v1440 = vadd.f32 0.0, %v1439
        %v1441 = vpop.f32.mrf.mxu0
        %1442 = vmatprep.mubr.f32.mxu0 %v763
        %1443 = vmatmul.mubr.f32.gmra.mxu0 %v761
        %v1444 = vpop.f32.mrf.mxu0
        %v1445 = vadd.f32 0.0, %v1444
        %v1446 = vpop.f32.mrf.mxu0
        %1447 = vmatprep.mubr.f32.mxu0 %v769
        %1448 = vmatmul.mubr.f32.gmra.mxu0 %v767
        %v1449 = vpop.f32.mrf.mxu0
        %v1450 = vadd.f32 0.0, %v1449
        %v1451 = vpop.f32.mrf.mxu0
        %1452 = vmatprep.mubr.f32.mxu0 %v775
        %1453 = vmatmul.mubr.f32.gmra.mxu0 %v773
        %v1454 = vpop.f32.mrf.mxu0
        %v1455 = vadd.f32 0.0, %v1454
        %v1456 = vpop.f32.mrf.mxu0
        %1457 = vmatprep.mubr.f32.mxu0 %v781
        %1458 = vmatmul.mubr.f32.gmra.mxu0 %v779
        %v1459 = vpop.f32.mrf.mxu0
        %v1460 = vadd.f32 0.0, %v1459
        %v1461 = vpop.f32.mrf.mxu0
        %1462 = vmatprep.mubr.f32.mxu0 %v787
        %1463 = vmatmul.mubr.f32.gmra.mxu0 %v785
        %v1464 = vpop.f32.mrf.mxu0
        %v1465 = vadd.f32 0.0, %v1464
        %v1466 = vpop.f32.mrf.mxu0
        %1467 = vmatprep.mubr.f32.mxu0 %v793
        %1468 = vmatmul.mubr.f32.gmra.mxu0 %v791
        %v1469 = vpop.f32.mrf.mxu0
        %v1470 = vadd.f32 0.0, %v1469
        %v1471 = vpop.f32.mrf.mxu0
        %1472 = vmatprep.mubr.f32.mxu0 %v799
        %1473 = vmatmul.mubr.f32.gmra.mxu0 %v797
        %v1474 = vpop.f32.mrf.mxu0
        %v1475 = vadd.f32 0.0, %v1474
        %v1476 = vpop.f32.mrf.mxu0
        %1477 = vmatprep.mubr.f32.mxu0 %v805
        %1478 = vmatmul.mubr.f32.gmra.mxu0 %v803
        %v1479 = vpop.f32.mrf.mxu0
        %v1480 = vadd.f32 0.0, %v1479
        %v1481 = vpop.f32.mrf.mxu0
        %1482 = vmatprep.mubr.f32.mxu0 %v811
        %1483 = vmatmul.mubr.f32.gmra.mxu0 %v809
        %v1484 = vpop.f32.mrf.mxu0
        %v1485 = vadd.f32 0.0, %v1484
        %v1486 = vpop.f32.mrf.mxu0
        %1487 = vmatprep.mubr.f32.mxu0 %v817
        %1488 = vmatmul.mubr.f32.gmra.mxu0 %v815
        %v1489 = vpop.f32.mrf.mxu0
        %v1490 = vadd.f32 0.0, %v1489
        %v1491 = vpop.f32.mrf.mxu0
        %1492 = vmatprep.mubr.f32.mxu0 %v823
        %1493 = vmatmul.mubr.f32.gmra.mxu0 %v821
        %v1494 = vpop.f32.mrf.mxu0
        %v1495 = vadd.f32 0.0, %v1494
        %v1496 = vpop.f32.mrf.mxu0
        %1497 = vdwg.mxu0
        %v1498 = vld [vmem:[%s6] sm:$0xff]
        %v1499 = vld [vmem:[%s6 + $0x8] sm:$0xff]
        %v1500 = vld [vmem:[%s6 + $0x10] sm:$0xff]
        %v1501 = vld [vmem:[%s6 + $0x18] sm:$0xff]
        %v1502 = vld [vmem:[%s6 + $0x20] sm:$0xff]
        %v1503 = vld [vmem:[%s6 + $0x28] sm:$0xff]
        %v1504 = vld [vmem:[%s6 + $0x30] sm:$0xff]
        %v1505 = vld [vmem:[%s6 + $0x38] sm:$0xff]
        %v1506 = vld [vmem:[%s6 + $0x40] sm:$0xff]
        %v1507 = vld [vmem:[%s6 + $0x48] sm:$0xff]
        %v1508 = vld [vmem:[%s6 + $0x50] sm:$0xff]
        %v1509 = vld [vmem:[%s6 + $0x58] sm:$0xff]
        %v1510 = vld [vmem:[%s6 + $0x60] sm:$0xff]
        %v1511 = vld [vmem:[%s6 + $0x68] sm:$0xff]
        %v1512 = vld [vmem:[%s6 + $0x70] sm:$0xff]
        %v1513 = vld [vmem:[%s6 + $0x78] sm:$0xff]
        %v1514 = vmul.f32 %v1420, %v1498
        %v1515 = vmul.f32 %v1425, %v1499
        %v1516 = vmul.f32 %v1430, %v1500
        %v1517 = vmul.f32 %v1435, %v1501
        %v1518 = vmul.f32 %v1440, %v1502
        %v1519 = vmul.f32 %v1445, %v1503
        %v1520 = vmul.f32 %v1450, %v1504
        %v1521 = vmul.f32 %v1455, %v1505
        %v1522 = vmul.f32 %v1460, %v1506
        %v1523 = vmul.f32 %v1465, %v1507
        %v1524 = vmul.f32 %v1470, %v1508
        %v1525 = vmul.f32 %v1475, %v1509
        %v1526 = vmul.f32 %v1480, %v1510
        %v1527 = vmul.f32 %v1485, %v1511
        %v1528 = vmul.f32 %v1490, %v1512
        %v1529 = vmul.f32 %v1495, %v1513
        %1530 = vmatprep.subr.mxu0 %v1112
        %1531 = vmatpush1.msra.mxu0 %v1111
        %1532 = vmatprep.subr.mxu0 %v1110
        %1533 = vmatpush1.msra.mxu0 %v1109
        %1534 = vmatprep.subr.mxu0 %v1108
        %1535 = vmatpush1.msra.mxu0 %v1107
        %1536 = vmatprep.subr.mxu0 %v1106
        %1537 = vmatpush1.msra.mxu0 %v1105
        %1538 = vmatprep.subr.mxu0 %v1104
        %1539 = vmatpush1.msra.mxu0 %v1103
        %1540 = vmatprep.subr.mxu0 %v1102
        %1541 = vmatpush1.msra.mxu0 %v1101
        %1542 = vmatprep.subr.mxu0 %v1100
        %1543 = vmatpush1.msra.mxu0 %v1099
        %1544 = vmatprep.subr.mxu0 %v1098
        %1545 = vmatpush1.msra.mxu0 %v1097
        %1546 = vmatprep.subr.mxu0 %v1096
        %1547 = vmatpush1.msra.mxu0 %v1095
        %1548 = vmatprep.subr.mxu0 %v1094
        %1549 = vmatpush1.msra.mxu0 %v1093
        %1550 = vmatprep.subr.mxu0 %v1092
        %1551 = vmatpush1.msra.mxu0 %v1091
        %1552 = vmatprep.subr.mxu0 %v1090
        %1553 = vmatpush1.msra.mxu0 %v1089
        %1554 = vmatprep.subr.mxu0 %v1088
        %1555 = vmatpush1.msra.mxu0 %v1087
        %1556 = vmatprep.subr.mxu0 %v1086
        %1557 = vmatpush1.msra.mxu0 %v1085
        %1558 = vmatprep.subr.mxu0 %v1084
        %1559 = vmatpush1.msra.mxu0 %v1083
        %1560 = vmatprep.subr.mxu0 %v1082
        %1561 = vmatpush1.msra.mxu0 %v1081
        %1562 = vmatprep.subr.mxu0 0.0
        %1563 = vmatpush2.msra.mxu0 0.0
        %1564 = vmatprep.subr.mxu0 0.0
        %1565 = vmatpush2.msra.mxu0 0.0
        %1566 = vmatprep.subr.mxu0 0.0
        %1567 = vmatpush2.msra.mxu0 0.0
        %1568 = vmatprep.subr.mxu0 0.0
        %1569 = vmatpush2.msra.mxu0 0.0
        %1570 = vmatprep.subr.mxu0 0.0
        %1571 = vmatpush2.msra.mxu0 0.0
        %1572 = vmatprep.subr.mxu0 0.0
        %1573 = vmatpush2.msra.mxu0 0.0
        %1574 = vmatprep.subr.mxu0 0.0
        %1575 = vmatpush2.msra.mxu0 0.0
        %1576 = vmatprep.subr.mxu0 0.0
        %1577 = vmatpush2.msra.mxu0 0.0
        %1578 = vmatprep.subr.mxu0 0.0
        %1579 = vmatpush2.msra.mxu0 0.0
        %1580 = vmatprep.subr.mxu0 0.0
        %1581 = vmatpush2.msra.mxu0 0.0
        %1582 = vmatprep.subr.mxu0 0.0
        %1583 = vmatpush2.msra.mxu0 0.0
        %1584 = vmatprep.subr.mxu0 0.0
        %1585 = vmatpush2.msra.mxu0 0.0
        %1586 = vmatprep.subr.mxu0 0.0
        %1587 = vmatpush2.msra.mxu0 0.0
        %1588 = vmatprep.subr.mxu0 0.0
        %1589 = vmatpush2.msra.mxu0 0.0
        %1590 = vmatprep.subr.mxu0 0.0
        %1591 = vmatpush2.msra.mxu0 0.0
        %1592 = vmatprep.subr.mxu0 0.0
        %1593 = vmatpush2.msra.mxu0 0.0
        %1594 = vmatprep.mubr.f32.mxu0 0.0
        %1595 = vmatmul.mubr.f32.gmra.mxu0 %v1514
        %v1596 = vpop.f32.mrf.mxu0
        %v1597 = vadd.f32 0.0, %v1596
        %v1598 = vpop.f32.mrf.mxu0
        %v1599 = vadd.f32 0.0, %v1598
        %1600 = vmatprep.mubr.f32.mxu0 0.0
        %1601 = vmatmul.mubr.f32.gmra.mxu0 %v1515
        %v1602 = vpop.f32.mrf.mxu0
        %v1603 = vadd.f32 0.0, %v1602
        %v1604 = vpop.f32.mrf.mxu0
        %v1605 = vadd.f32 0.0, %v1604
        %1606 = vmatprep.mubr.f32.mxu0 0.0
        %1607 = vmatmul.mubr.f32.gmra.mxu0 %v1516
        %v1608 = vpop.f32.mrf.mxu0
        %v1609 = vadd.f32 0.0, %v1608
        %v1610 = vpop.f32.mrf.mxu0
        %v1611 = vadd.f32 0.0, %v1610
        %1612 = vmatprep.mubr.f32.mxu0 0.0
        %1613 = vmatmul.mubr.f32.gmra.mxu0 %v1517
        %v1614 = vpop.f32.mrf.mxu0
        %v1615 = vadd.f32 0.0, %v1614
        %v1616 = vpop.f32.mrf.mxu0
        %v1617 = vadd.f32 0.0, %v1616
        %1618 = vmatprep.mubr.f32.mxu0 0.0
        %1619 = vmatmul.mubr.f32.gmra.mxu0 %v1518
        %v1620 = vpop.f32.mrf.mxu0
        %v1621 = vadd.f32 0.0, %v1620
        %v1622 = vpop.f32.mrf.mxu0
        %v1623 = vadd.f32 0.0, %v1622
        %1624 = vmatprep.mubr.f32.mxu0 0.0
        %1625 = vmatmul.mubr.f32.gmra.mxu0 %v1519
        %v1626 = vpop.f32.mrf.mxu0
        %v1627 = vadd.f32 0.0, %v1626
        %v1628 = vpop.f32.mrf.mxu0
        %v1629 = vadd.f32 0.0, %v1628
        %1630 = vmatprep.mubr.f32.mxu0 0.0
        %1631 = vmatmul.mubr.f32.gmra.mxu0 %v1520
        %v1632 = vpop.f32.mrf.mxu0
        %v1633 = vadd.f32 0.0, %v1632
        %v1634 = vpop.f32.mrf.mxu0
        %v1635 = vadd.f32 0.0, %v1634
        %1636 = vmatprep.mubr.f32.mxu0 0.0
        %1637 = vmatmul.mubr.f32.gmra.mxu0 %v1521
        %v1638 = vpop.f32.mrf.mxu0
        %v1639 = vadd.f32 0.0, %v1638
        %v1640 = vpop.f32.mrf.mxu0
        %v1641 = vadd.f32 0.0, %v1640
        %1642 = vmatprep.mubr.f32.mxu0 0.0
        %1643 = vmatmul.mubr.f32.gmra.mxu0 %v1522
        %v1644 = vpop.f32.mrf.mxu0
        %v1645 = vadd.f32 0.0, %v1644
        %v1646 = vpop.f32.mrf.mxu0
        %v1647 = vadd.f32 0.0, %v1646
        %1648 = vmatprep.mubr.f32.mxu0 0.0
        %1649 = vmatmul.mubr.f32.gmra.mxu0 %v1523
        %v1650 = vpop.f32.mrf.mxu0
        %v1651 = vadd.f32 0.0, %v1650
        %v1652 = vpop.f32.mrf.mxu0
        %v1653 = vadd.f32 0.0, %v1652
        %1654 = vmatprep.mubr.f32.mxu0 0.0
        %1655 = vmatmul.mubr.f32.gmra.mxu0 %v1524
        %v1656 = vpop.f32.mrf.mxu0
        %v1657 = vadd.f32 0.0, %v1656
        %v1658 = vpop.f32.mrf.mxu0
        %v1659 = vadd.f32 0.0, %v1658
        %1660 = vmatprep.mubr.f32.mxu0 0.0
        %1661 = vmatmul.mubr.f32.gmra.mxu0 %v1525
        %v1662 = vpop.f32.mrf.mxu0
        %v1663 = vadd.f32 0.0, %v1662
        %v1664 = vpop.f32.mrf.mxu0
        %v1665 = vadd.f32 0.0, %v1664
        %1666 = vmatprep.mubr.f32.mxu0 0.0
        %1667 = vmatmul.mubr.f32.gmra.mxu0 %v1526
        %v1668 = vpop.f32.mrf.mxu0
        %v1669 = vadd.f32 0.0, %v1668
        %v1670 = vpop.f32.mrf.mxu0
        %v1671 = vadd.f32 0.0, %v1670
        %1672 = vmatprep.mubr.f32.mxu0 0.0
        %1673 = vmatmul.mubr.f32.gmra.mxu0 %v1527
        %v1674 = vpop.f32.mrf.mxu0
        %v1675 = vadd.f32 0.0, %v1674
        %v1676 = vpop.f32.mrf.mxu0
        %v1677 = vadd.f32 0.0, %v1676
        %1678 = vmatprep.mubr.f32.mxu0 0.0
        %1679 = vmatmul.mubr.f32.gmra.mxu0 %v1528
        %v1680 = vpop.f32.mrf.mxu0
        %v1681 = vadd.f32 0.0, %v1680
        %v1682 = vpop.f32.mrf.mxu0
        %v1683 = vadd.f32 0.0, %v1682
        %1684 = vmatprep.mubr.f32.mxu0 0.0
        %1685 = vmatmul.mubr.f32.gmra.mxu0 %v1529
        %v1686 = vpop.f32.mrf.mxu0
        %v1687 = vadd.f32 0.0, %v1686
        %v1688 = vpop.f32.mrf.mxu0
        %v1689 = vadd.f32 0.0, %v1688
        %1690 = vdwg.mxu0
        %v1691 = vld [vmem:[%s2] sm:$0xf]
        %v1692 = vld [vmem:[%s3] sm:$0xf]
        %v1693 = vld [vmem:[%s4] sm:$0xf]
        %v1694 = vld [vmem:[%s5] sm:$0xf]
        %1696 = vset.pattern.permute.xlu0 0
        %1697 = vperm.xlu0 %1696, %v1692
        %v1698 = vpop.permute.xlu0 %1697
        %1700 = vmatprep.subr.mxu0 %v1689
        %1701 = vmatpush1.msra.mxu0 %v1687
        %1702 = vmatprep.subr.mxu0 %v1683
        %1703 = vmatpush1.msra.mxu0 %v1681
        %1704 = vmatprep.subr.mxu0 %v1677
        %1705 = vmatpush1.msra.mxu0 %v1675
        %1706 = vmatprep.subr.mxu0 %v1671
        %1707 = vmatpush1.msra.mxu0 %v1669
        %1708 = vmatprep.subr.mxu0 %v1665
        %1709 = vmatpush1.msra.mxu0 %v1663
        %1710 = vmatprep.subr.mxu0 %v1659
        %1711 = vmatpush1.msra.mxu0 %v1657
        %1712 = vmatprep.subr.mxu0 %v1653
        %1713 = vmatpush1.msra.mxu0 %v1651
        %1714 = vmatprep.subr.mxu0 %v1647
        %1715 = vmatpush1.msra.mxu0 %v1645
        %1716 = vmatprep.subr.mxu0 %v1641
        %1717 = vmatpush1.msra.mxu0 %v1639
        %1718 = vmatprep.subr.mxu0 %v1635
        %1719 = vmatpush1.msra.mxu0 %v1633
        %1720 = vmatprep.subr.mxu0 %v1629
        %1721 = vmatpush1.msra.mxu0 %v1627
        %1722 = vmatprep.subr.mxu0 %v1623
        %1723 = vmatpush1.msra.mxu0 %v1621
        %1724 = vmatprep.subr.mxu0 %v1617
        %1725 = vmatpush1.msra.mxu0 %v1615
        %1726 = vmatprep.subr.mxu0 %v1611
        %1727 = vmatpush1.msra.mxu0 %v1609
        %1728 = vmatprep.subr.mxu0 %v1605
        %1729 = vmatpush1.msra.mxu0 %v1603
        %1730 = vmatprep.subr.mxu0 %v1599
        %1731 = vmatpush1.msra.mxu0 %v1597
        %1732 = vmatprep.subr.mxu0 0.0
        %1733 = vmatpush2.msra.mxu0 0.0
        %1734 = vmatprep.subr.mxu0 0.0
        %1735 = vmatpush2.msra.mxu0 0.0
        %1736 = vmatprep.subr.mxu0 0.0
        %1737 = vmatpush2.msra.mxu0 0.0
        %1738 = vmatprep.subr.mxu0 0.0
        %1739 = vmatpush2.msra.mxu0 0.0
        %1740 = vmatprep.subr.mxu0 0.0
        %1741 = vmatpush2.msra.mxu0 0.0
        %1742 = vmatprep.subr.mxu0 0.0
        %1743 = vmatpush2.msra.mxu0 0.0
        %1744 = vmatprep.subr.mxu0 0.0
        %1745 = vmatpush2.msra.mxu0 0.0
        %1746 = vmatprep.subr.mxu0 0.0
        %1747 = vmatpush2.msra.mxu0 0.0
        %1748 = vmatprep.subr.mxu0 0.0
        %1749 = vmatpush2.msra.mxu0 0.0
        %1750 = vmatprep.subr.mxu0 0.0
        %1751 = vmatpush2.msra.mxu0 0.0
        %1752 = vmatprep.subr.mxu0 0.0
        %1753 = vmatpush2.msra.mxu0 0.0
        %1754 = vmatprep.subr.mxu0 0.0
        %1755 = vmatpush2.msra.mxu0 0.0
        %1756 = vmatprep.subr.mxu0 0.0
        %1757 = vmatpush2.msra.mxu0 0.0
        %1758 = vmatprep.subr.mxu0 0.0
        %1759 = vmatpush2.msra.mxu0 0.0
        %1760 = vmatprep.subr.mxu0 0.0
        %1761 = vmatpush2.msra.mxu0 0.0
        %1762 = vmatprep.subr.mxu0 0.0
        %1763 = vmatpush2.msra.mxu0 0.0
        %1764 = vmatprep.mubr.f32.mxu0 0.0
        %1765 = vmatmul.mubr.f32.gmra.mxu0 %v1691
        %v1766 = vpop.f32.mrf.mxu0
        %v1767 = vadd.f32 %v1698, %v1766
        %v1768 = vpop.f32.mrf.mxu0
        %v1769 = vadd.f32 %v1698, %v1768
        %1770 = vdwg.mxu0
        %vm1771 = vcmask 1043456
        %v1772 = vsel %vm1771, %v1767, 0.0
        %v1773 = vsel %vm1771, %v1769, 0.0
        %v1774 = vadd.f32 %v1772, %v1773
        %1775 = vadd.xlane.f32.xlu0 %v1774
        %v1776 = vpop.xlane.xlu0 %1775
        %v1777 = vrot.slane %v1776, 4
        %v1778 = vadd.f32 %v1776, %v1777
        %v1779 = vrot.slane %v1778, 2
        %v1780 = vadd.f32 %v1778, %v1779
        %v1781 = vrot.slane %v1780, 1
        %v1782 = vadd.f32 %v1780, %v1781
        %s1783 = vtos %v1782
        %v1784 = vstv %s1783
        %v1785 = vrcp.pop 1024.0
        %v1786 = vmul.f32 %v1784, %v1785
        %v1787 = vsub.f32 %v1767, %v1786
        %v1788 = vsub.f32 %v1769, %v1786
        %v1789 = vmul.f32 %v1787, %v1787
        %v1790 = vmul.f32 %v1788, %v1788
        %v1791 = vsel %vm1771, %v1789, 0.0
        %v1792 = vsel %vm1771, %v1790, 0.0
        %v1793 = vadd.f32 %v1791, %v1792
        %1794 = vadd.xlane.f32.xlu0 %v1793
        %v1795 = vpop.xlane.xlu0 %1794
        %v1796 = vrot.slane %v1795, 4
        %v1797 = vadd.f32 %v1795, %v1796
        %v1798 = vrot.slane %v1797, 2
        %v1799 = vadd.f32 %v1797, %v1798
        %v1800 = vrot.slane %v1799, 1
        %v1801 = vadd.f32 %v1799, %v1800
        %s1802 = vtos %v1801
        %v1803 = vstv %s1802
        %v1804 = vmul.f32 %v1803, %v1785
        %v1805 = vadd.f32 %v1804, 1e-05
        %v1806 = vrsqrt.pop %v1805
        %v1807 = vmul.f32 %v1693, %v1806
        %1809 = vset.pattern.permute.xlu0 0
        %1810 = vperm.xlu0 %1809, %v1807
        %v1811 = vpop.permute.xlu0 %1810
        %v1813 = vmul.f32 %v1787, %v1811
        %v1814 = vmul.f32 %v1788, %v1811
        %1816 = vset.pattern.permute.xlu0 0
        %1817 = vperm.xlu0 %1816, %v1694
        %v1818 = vpop.permute.xlu0 %1817
        %v1820 = vadd.f32 %v1813, %v1818
        %v1821 = vadd.f32 %v1814, %v1818
        %v1824 = vcombine.low %v1820, %v1821
        %1826 = vst [vmem:[%s271] sm:$0xff] %v1824
        %s1827 = sand.u32 %s181, 1
        %s1828 = scalar_lea.sflag [#allocation3], %s1827
        %s1829 = sand.u32 %s181, 1
        %s1830 = smul.addr %s1829, 8
        %s1831 = scalar_lea.vmem [#allocation2], %s1830
        // Predicated region
        $region49: #{tpu_custom_call.1} parent=47 // pred_check
          %p1832 = pneg %p191
        $region50: #{tpu_custom_call.1} parent=47 // pred_check_branch
          %1834 = sbr.rel (%p1832) target = $region52
        $region51: #{tpu_custom_call.1} parent=47 // pred_region
          %s1836 = ssub.s32 128, 128
          %1837 = vsyncadd %s1828, %s1836
          %s1838 = smul.addr %s21, 2
          %s1839 = smul.addr %s1838, 64
          %s1840 = scalar_lea.hbm %s7, %s1839
          %s1842 = sshll.u32 %s1831, 4
          %s1843 = int_to_ptr.vmem [resolvable:$true] %s1842
          %1845 = dma.vmem_to_hbm [thread:$0]  %s1843, 128, %s1840, %s1828
        $region52: #{tpu_custom_call.1} parent=47 // pred_fallthru
          _
      $region48: #{tpu_custom_call.1} parent=5 // pred_fallthru
        _
      %p1846 = scmp.le.s32.totalorder 2, %s16
      // Predicated region
      $region53: #{tpu_custom_call.1} parent=5 // pred_check
        %p1847 = pneg %p1846
      $region54: #{tpu_custom_call.1} parent=5 // pred_check_branch
        %1849 = sbr.rel (%p1847) target = $region56
      $region55: #{tpu_custom_call.1} parent=5 // pred_region
        %s1850 = ssub.s32 %s16, 2
        // Predicated region
        $region57: #{tpu_custom_call.1} parent=55 // pred_check
          %p1851 = pneg %p197
        $region58: #{tpu_custom_call.1} parent=55 // pred_check_branch
          %1853 = sbr.rel (%p1851) target = $region60
        $region59: #{tpu_custom_call.1} parent=55 // pred_region
          %s1854 = sand.u32 %s182, 1
          %s1855 = scalar_lea.sflag [#allocation3], %s1854
          %s1856 = sand.u32 %s182, 1
          %s1857 = smul.addr %s1856, 8
          %s1858 = scalar_lea.vmem [#allocation2], %s1857
          %1859 = dma.done %s1855, 128
        $region60: #{tpu_custom_call.1} parent=55 // pred_fallthru
          _
      $region56: #{tpu_custom_call.1} parent=5 // pred_fallthru
        _
    $region6: #{tpu_custom_call.1} parent=1 // loop_footer
      %s20 = sadd.s32 1, %s16
    $region7: #{tpu_custom_call.1} parent=1 // loop_footer_branch
      %15 = sbr.rel target = $region3
    $region8: #{tpu_custom_call.1} parent=1 // loop_exit
      _
    %1860 = vsyncpa [#allocation3], 1
    %s1861 = scalar_lea.sflag [#allocation3], 1
    %1862 = vsyncpa %s1861, 1

</llo_original>
